<compile_context>
chip_gen: v6e
topology: v6e:2x2x1
jax: 0.10.0
libtpu: 0.0.40
codegen_flags: <defaults>
</compile_context>

<pallas_src>
import functools
import math

import jax
import jax.numpy as jnp
from jax.experimental import pallas as pl
from jax.experimental.pallas import tpu as pltpu


# ----------------------------------------------------------------------------- helpers

def _device_kind():
    try:
        return jax.devices()[0].device_kind.lower()
    except Exception:
        return ""


def _vmem_limit_bytes():
    # v7x has 64 MiB VMEM per TensorCore -> leave headroom; v5e/v6e have 128 MiB.
    return 48 * 1024 * 1024 if "v7" in _device_kind() else 100 * 1024 * 1024


def _q_tile_cap():
    return 256 if "v7" in _device_kind() else 512


@functools.lru_cache(maxsize=None)
def _buffered_supported():
    """One-time feature probe: can we single-buffer constant blocks with pl.Buffered(1)?"""
    if not hasattr(pl, "Buffered"):
        return False
    try:
        def _copy(x_ref, o_ref):
            o_ref[...] = x_ref[...]

        x = jnp.zeros((8, 128), jnp.float32)
        pl.pallas_call(
            _copy,
            out_shape=jax.ShapeDtypeStruct((8, 128), jnp.float32),
            grid=(1,),
            in_specs=[pl.BlockSpec((8, 128), lambda i: (0, 0),
                                   pipeline_mode=pl.Buffered(1))],
            out_specs=pl.BlockSpec((8, 128), lambda i: (0, 0)),
        )(x)
        return True
    except Exception:
        return False


def _const_spec(shape):
    """BlockSpec for weights: constant block index; single-buffered when supported."""
    index_map = lambda b, t: (0,) * len(shape)
    if _buffered_supported():
        return pl.BlockSpec(shape, index_map, pipeline_mode=pl.Buffered(1))
    return pl.BlockSpec(shape, index_map)


def _canonicalize_mask(mask, lq, lk):
    """PyTorch path broadcasts a (1,1,Lq,Lk) mask over batch & heads."""
    m = jnp.asarray(mask, jnp.float32)
    if m.ndim == 4:
        if m.shape[0] != 1 or m.shape[1] != 1:
            # TODO(synk): per-batch / per-head masks would need a (B,H,Lq,Lk)-tiled mask input.
            raise NotImplementedError(
                "only masks broadcast over batch and heads are supported")
        m = m[0, 0]
    return jnp.broadcast_to(m, (lq, lk))


# ----------------------------------------------------------------------------- kernel

def _make_kernel(n_heads, d_depth, has_mask, with_attnw, compute_dtype):
    H, d = n_heads, d_depth

    def kernel(q_ref, k_ref, v_ref, wqT_ref, wkT_ref, wvT_ref, wcT_ref, *rest):
        if has_mask:
            mask_ref, *rest = rest
        if with_attnw:
            out_ref, attnw_ref, kproj, vproj, pvbuf = rest
        else:
            out_ref, kproj, vproj, pvbuf = rest
            attnw_ref = None

        t = pl.program_id(1)

        # K/V projections: one full-width (Lk, D)@(D, D) matmul each, computed only
        # on the first query tile of each batch element and reused from VMEM scratch
        # for every following query tile (query-tile axis is "arbitrary").
        @pl.when(t == 0)
        def _():
            kproj[...] = jnp.dot(k_ref[0], wkT_ref[...],
                                 preferred_element_type=jnp.float32).astype(compute_dtype)
            vproj[...] = jnp.dot(v_ref[0], wvT_ref[...],
                                 preferred_element_type=jnp.float32).astype(compute_dtype)

        # Q projection: single full-width matmul (scale already folded into WqT).
        qp = jnp.dot(q_ref[0], wqT_ref[...],
                     preferred_element_type=jnp.float32).astype(compute_dtype)   # (Tq, D)

        mask_bias = mask_ref[...].astype(jnp.float32) if has_mask else None      # (Tq, Lk)

        # TODO(synk): for large H switch to lax.fori_loop / a head grid axis to bound live ranges.
        for h in range(H):
            lo = h * d
            qh = qp[:, lo:lo + d]                                                # (Tq, d)
            kh = kproj[:, lo:lo + d]                                             # (Lk, d)
            vh = vproj[:, lo:lo + d]                                             # (Lk, d)

            # Scores: contract the last dim of both operands (MXU-native, no transpose).
            s = jax.lax.dot_general(qh, kh, (((1,), (1,)), ((), ())),
                                    preferred_element_type=jnp.float32)          # (Tq, Lk)
            if has_mask:
                s = s + mask_bias

            # Softmax over keys in f32; reciprocal goes to the EUP slot.
            # NOTE: approx reciprocal -> rows sum to 1 only to ~1e-3.
            m = jnp.max(s, axis=-1, keepdims=True)
            e = jnp.exp(s - m)
            l = jnp.sum(e, axis=-1, keepdims=True)
            w = e * pl.reciprocal(l, approx=True)

            if with_attnw:
                attnw_ref[0, h] = w.astype(attnw_ref.dtype)

            pv = jnp.dot(w.astype(compute_dtype), vh,
                         preferred_element_type=jnp.float32)                     # (Tq, d)
            # Stage at lane offset h*d; the output projection is one fused matmul below.
            pvbuf[:, lo:lo + d] = pv.astype(compute_dtype)

        out_ref[0] = jnp.dot(pvbuf[...], wcT_ref[...],
                             preferred_element_type=jnp.float32).astype(out_ref.dtype)

    return kernel


# ----------------------------------------------------------------------------- wrapper

def prepare_mha_params(wq, wk, wv, wc, n_heads, compute_dtype=jnp.bfloat16):
    """One-time host-side weight prep: transpose (PyTorch stores (out,in)), fold the
    1/sqrt(d) attention scale into Wq, cast to the MXU compute dtype."""
    D = wq.shape[0]
    assert D % n_heads == 0
    d = D // n_heads
    scale = 1.0 / math.sqrt(d)
    return {
        "n_heads": n_heads,
        "d_depth": d,
        "d_model": D,
        "compute_dtype": compute_dtype,
        "wqT": (jnp.asarray(wq, jnp.float32).T * scale).astype(compute_dtype),
        "wkT": jnp.asarray(wk, jnp.float32).T.astype(compute_dtype),
        "wvT": jnp.asarray(wv, jnp.float32).T.astype(compute_dtype),
        "wcT": jnp.asarray(wc, jnp.float32).T.astype(compute_dtype),
    }


def multi_head_attention(v, k, q, params, mask=None, neg_infty=-1e9,
                         return_attn_weights=True, attnw_dtype=jnp.bfloat16,
                         out_dtype=jnp.float32):
    """Mirrors MultiHeadAttention.forward(v, k, q, mask). Returns (attn_out, attn_weights)."""
    H = params["n_heads"]
    d = params["d_depth"]
    D = params["d_model"]
    compute_dtype = params["compute_dtype"]

    B, Lq, Dq = q.shape
    Lk = k.shape[1]
    assert Dq == D and k.shape[2] == D and v.shape[2] == D and v.shape[1] == Lk

    # bf16 activations: halves the (1, Lk, D) K/V block DMA and VMEM footprint.
    q = jnp.asarray(q).astype(compute_dtype)
    k = jnp.asarray(k).astype(compute_dtype)
    v = jnp.asarray(v).astype(compute_dtype)

    # Query tiling: cap tile by generation; pad ragged Lq to a tile multiple (padded
    # rows see only real keys -> finite softmax; sliced off at the end).
    cap = _q_tile_cap()
    if Lq <= cap:
        Tq, Lq_pad = Lq, Lq
    else:
        Tq = cap
        Lq_pad = int(pl.cdiv(Lq, Tq)) * Tq
        if Lq_pad != Lq:
            q = jnp.pad(q, ((0, 0), (0, Lq_pad - Lq), (0, 0)))
    n_qt = Lq_pad // Tq

    has_mask = mask is not None
    mask_bias = None
    if has_mask:
        mask_bias = _canonicalize_mask(mask, Lq, Lk) * jnp.float32(neg_infty)
        if Lq_pad != Lq:
            mask_bias = jnp.pad(mask_bias, ((0, Lq_pad - Lq), (0, 0)))
        mask_bias = mask_bias.astype(compute_dtype)   # halves the per-step mask DMA

    grid = (B, n_qt)
    kernel = _make_kernel(H, d, has_mask, return_attn_weights, compute_dtype)

    in_specs = [
        pl.BlockSpec((1, Tq, D), lambda b, t: (b, t, 0)),   # q tile
        pl.BlockSpec((1, Lk, D), lambda b, t: (b, 0, 0)),   # k (block idx changes only with b)
        pl.BlockSpec((1, Lk, D), lambda b, t: (b, 0, 0)),   # v
        _const_spec((D, D)),                                # WqT (scale folded)
        _const_spec((D, D)),                                # WkT
        _const_spec((D, D)),                                # WvT
        _const_spec((D, D)),                                # WcT
    ]
    args = [q, k, v, params["wqT"], params["wkT"], params["wvT"], params["wcT"]]
    if has_mask:
        in_specs.append(pl.BlockSpec((Tq, Lk), lambda b, t: (t, 0)))
        args.append(mask_bias)

    out_specs = [pl.BlockSpec((1, Tq, D), lambda b, t: (b, t, 0))]
    out_shapes = [jax.ShapeDtypeStruct((B, Lq_pad, D), out_dtype)]
    if return_attn_weights:
        out_specs.append(pl.BlockSpec((1, H, Tq, Lk), lambda b, t: (b, 0, t, 0)))
        out_shapes.append(jax.ShapeDtypeStruct((B, H, Lq_pad, Lk), attnw_dtype))

    scratch_shapes = [
        pltpu.VMEM((Lk, D), compute_dtype),   # K projections, reused across query tiles
        pltpu.VMEM((Lk, D), compute_dtype),   # V projections
        pltpu.VMEM((Tq, D), compute_dtype),   # per-head PV staging for fused output proj
    ]

    itemsize = jnp.dtype(compute_dtype).itemsize
    flops = int(2 * B * (Lq_pad * D * D            # Q proj
                         + 2 * Lk * D * D          # K,V proj (once per batch element)
                         + 2 * Lq_pad * Lk * D     # scores + PV
                         + Lq_pad * D * D))        # output proj
    transcendentals = int(B * H * Lq_pad * Lk)
    bytes_accessed = int(
        (B * Lq_pad * D + 2 * B * Lk * D) * itemsize
        + 4 * D * D * itemsize
        + B * Lq_pad * D * jnp.dtype(out_dtype).itemsize
        + (B * H * Lq_pad * Lk * jnp.dtype(attnw_dtype).itemsize if return_attn_weights else 0)
        + (B * n_qt * Tq * Lk * itemsize if has_mask else 0))

    fn = pl.pallas_call(
        kernel,
        out_shape=tuple(out_shapes),
        grid_spec=pltpu.PrefetchScalarGridSpec(
            num_scalar_prefetch=0,
            grid=grid,
            in_specs=in_specs,
            out_specs=tuple(out_specs),
            scratch_shapes=scratch_shapes),
        compiler_params=pltpu.CompilerParams(
            # batch axis independent -> megacore "parallel"; query-tile axis must be
            # "arbitrary" because the K/V-projection scratch persists across it.
            dimension_semantics=("parallel", "arbitrary"),
            vmem_limit_bytes=_vmem_limit_bytes()),
        cost_estimate=pl.CostEstimate(flops=flops,
                                      transcendentals=transcendentals,
                                      bytes_accessed=bytes_accessed),
    )
    result = fn(*args)

    if return_attn_weights:
        out, attnw = result
        if Lq_pad != Lq:
            out, attnw = out[:, :Lq], attnw[:, :, :Lq]
        return out, attnw
    out = result[0]
    if Lq_pad != Lq:
        out = out[:, :Lq]
    return out, None


# ----------------------------------------------------------------------------- reference & test

def _reference(v, k, q, wq, wk, wv, wc, n_heads, mask=None, neg_infty=-1e9):
    B, L, D = q.shape
    H = n_heads
    d = D // H

    def split(x):
        return x.reshape(B, -1, H, d).transpose(0, 2, 1, 3)

    qh = split(q @ wq.T)
    kh = split(k @ wk.T)
    vh = split(v @ wv.T)
    s = jnp.einsum('bhld,bhmd->bhlm', qh, kh) * jax.lax.rsqrt(jnp.float32(d))
    if mask is not None:
        s = s + jnp.asarray(mask, jnp.float32) * neg_infty
    w = jax.nn.softmax(s, axis=-1)
    o = jnp.einsum('bhlm,bhmd->bhld', w, vh)
    o = o.transpose(0, 2, 1, 3).reshape(B, L, D)
    return o @ wc.T, w


if __name__ == "__main__":
    B, L, d_model, n_heads = 2, 8, 32, 4

    key = jax.random.PRNGKey(0)
    kq, kk, kv, kwq, kwk, kwv, kwc = jax.random.split(key, 7)

    q = jax.random.normal(kq, (B, L, d_model), dtype=jnp.float32)
    k = jax.random.normal(kk, (B, L, d_model), dtype=jnp.float32)
    v = jax.random.normal(kv, (B, L, d_model), dtype=jnp.float32)

    bound = 1.0 / math.sqrt(d_model)  # PyTorch nn.Linear default init range
    wq = jax.random.uniform(kwq, (d_model, d_model), jnp.float32, -bound, bound)
    wk = jax.random.uniform(kwk, (d_model, d_model), jnp.float32, -bound, bound)
    wv = jax.random.uniform(kwv, (d_model, d_model), jnp.float32, -bound, bound)
    wc = jax.random.uniform(kwc, (d_model, d_model), jnp.float32, -bound, bound)

    # One-time host-side weight prep (hoisted out of the call path).
    params = prepare_mha_params(wq, wk, wv, wc, n_heads)

    # --- no mask ---
    out, attn_w = multi_head_attention(v, k, q, params)
    out, attn_w = jax.block_until_ready((out, attn_w))
    ref_out, ref_w = _reference(v, k, q, wq, wk, wv, wc, n_heads)
    assert out.shape == (B, L, d_model)
    assert attn_w.shape == (B, n_heads, L, L)
    # bf16 MXU inputs (f32 accumulate / f32 softmax) + bf16 attn-weights -> loosened tol.
    assert jnp.allclose(out, ref_out, atol=2e-2, rtol=2e-2)
    assert jnp.allclose(attn_w.astype(jnp.float32), ref_w, atol=2e-2, rtol=2e-2)

    # --- causal-style mask (1 = masked out), broadcast over batch & heads ---
    causal_mask = (jnp.arange(L)[None, :] > jnp.arange(L)[:, None]).astype(jnp.float32)
    out_m, attn_w_m = multi_head_attention(v, k, q, params, mask=causal_mask)
    out_m, attn_w_m = jax.block_until_ready((out_m, attn_w_m))
    ref_out_m, ref_w_m = _reference(v, k, q, wq, wk, wv, wc, n_heads, mask=causal_mask)
    assert jnp.allclose(out_m, ref_out_m, atol=2e-2, rtol=2e-2)
    assert jnp.allclose(attn_w_m.astype(jnp.float32), ref_w_m, atol=2e-2, rtol=2e-2)

    # --- production path: no attention-weights output ---
    out_nw, none_w = multi_head_attention(v, k, q, params, return_attn_weights=False)
    out_nw = jax.block_until_ready(out_nw)
    assert none_w is None
    assert jnp.allclose(out_nw, ref_out, atol=2e-2, rtol=2e-2)

    print("KERNEL_OK")
</pallas_src>

<mosaic_0001>
module attributes {stable_mosaic.version = 11 : i64} {
  func.func @_copy(%arg0: i32, %arg1: memref<8x128xf32, #tpu.memory_space<vmem>>, %arg2: memref<8x128xf32, #tpu.memory_space<vmem>>) attributes {dimension_semantics = [#tpu.dimension_semantics<arbitrary>], iteration_bounds = array<i64: 1>, scalar_prefetch = 0 : i64, scratch_operands = 0 : i64, tpu.core_type = #tpu.core_type<tc>, window_params = [{pipeline_mode = #tpu.pipeline_mode<synchronous>, transform_indices = @transform_0, window_bounds = array<i64: 8, 128>}, {pipeline_mode = #tpu.pipeline_mode<synchronous>, transform_indices = @transform_1, window_bounds = array<i64: 8, 128>}]} {
    %c0 = arith.constant 0 : index
    %c0_0 = arith.constant 0 : index
    %0 = vector.load %arg1[%c0, %c0_0] : memref<8x128xf32, #tpu.memory_space<vmem>>, vector<8x128xf32>
    %c0_1 = arith.constant 0 : index
    %c0_2 = arith.constant 0 : index
    %1 = vector.load %arg2[%c0_1, %c0_2] : memref<8x128xf32, #tpu.memory_space<vmem>>, vector<8x128xf32>
    tpu.vector_store %arg2[%c0_1, %c0_2], %0 {strides = array<i32>} : memref<8x128xf32, #tpu.memory_space<vmem>>, vector<8x128xf32>,
    return
  }
  func.func @transform_0(%arg0: i32) -> (i32, i32) {
    %c0_i32 = arith.constant 0 : i32
    %c0_i32_0 = arith.constant 0 : i32
    %c0_i32_1 = arith.constant 0 : i32
    return %c0_i32, %c0_i32_0 : i32, i32
  }
  func.func @transform_1(%arg0: i32) -> (i32, i32) {
    %c0_i32 = arith.constant 0 : i32
    %c0_i32_0 = arith.constant 0 : i32
    %c0_i32_1 = arith.constant 0 : i32
    return %c0_i32, %c0_i32_0 : i32, i32
  }
}

module attributes {stable_mosaic.version = 11 : i64} {
  func.func @kernel(%arg0: i32, %arg1: i32, %arg2: memref<1x8x32xbf16, #tpu.memory_space<vmem>>, %arg3: memref<1x8x32xbf16, #tpu.memory_space<vmem>>, %arg4: memref<1x8x32xbf16, #tpu.memory_space<vmem>>, %arg5: memref<32x32xbf16, #tpu.memory_space<vmem>>, %arg6: memref<32x32xbf16, #tpu.memory_space<vmem>>, %arg7: memref<32x32xbf16, #tpu.memory_space<vmem>>, %arg8: memref<32x32xbf16, #tpu.memory_space<vmem>>, %arg9: memref<1x8x32xf32, #tpu.memory_space<vmem>>, %arg10: memref<1x4x8x8xbf16, #tpu.memory_space<vmem>>, %arg11: memref<8x32xbf16, #tpu.memory_space<vmem>>, %arg12: memref<8x32xbf16, #tpu.memory_space<vmem>>, %arg13: memref<8x32xbf16, #tpu.memory_space<vmem>>) attributes {dimension_semantics = [#tpu.dimension_semantics<parallel>, #tpu.dimension_semantics<arbitrary>], iteration_bounds = array<i64: 2, 1>, scalar_prefetch = 0 : i64, scratch_operands = 3 : i64, tpu.core_type = #tpu.core_type<tc>, window_params = [{transform_indices = @transform_0, window_bounds = array<i64: 1, 8, 32>}, {transform_indices = @transform_1, window_bounds = array<i64: 1, 8, 32>}, {transform_indices = @transform_2, window_bounds = array<i64: 1, 8, 32>}, {pipeline_mode = #tpu.pipeline_mode<synchronous>, transform_indices = @transform_3, window_bounds = array<i64: 32, 32>}, {pipeline_mode = #tpu.pipeline_mode<synchronous>, transform_indices = @transform_4, window_bounds = array<i64: 32, 32>}, {pipeline_mode = #tpu.pipeline_mode<synchronous>, transform_indices = @transform_5, window_bounds = array<i64: 32, 32>}, {pipeline_mode = #tpu.pipeline_mode<synchronous>, transform_indices = @transform_6, window_bounds = array<i64: 32, 32>}, {transform_indices = @transform_7, window_bounds = array<i64: 1, 8, 32>}, {transform_indices = @transform_8, window_bounds = array<i64: 1, 4, 8, 8>}]} {
    %c0_i32 = arith.constant 0 : i32
    %0 = arith.cmpi eq, %arg1, %c0_i32 : i32
    %1 = arith.extui %0 : i1 to i32
    %c0_i32_0 = arith.constant 0 : i32
    %2 = arith.cmpi ne, %1, %c0_i32_0 : i32
    scf.if %2 {
      %c0_63 = arith.constant 0 : index
      %c0_64 = arith.constant 0 : index
      %c0_65 = arith.constant 0 : index
      %102 = vector.load %arg3[%c0_63, %c0_64, %c0_65] : memref<1x8x32xbf16, #tpu.memory_space<vmem>>, vector<1x8x32xbf16>
      %103 = vector.shape_cast %102 : vector<1x8x32xbf16> to vector<8x32xbf16>
      %c0_66 = arith.constant 0 : index
      %c0_67 = arith.constant 0 : index
      %104 = vector.load %arg6[%c0_66, %c0_67] : memref<32x32xbf16, #tpu.memory_space<vmem>>, vector<32x32xbf16>
      %cst_68 = arith.constant dense<0.000000e+00> : vector<8x32xf32>
      %105 = tpu.matmul %103, %104, %cst_68 {dimension_numbers = #tpu.dot_dimension_numbers<[1], [0], [0], [1], [0, 0, 1, 1], [], []>} : vector<8x32xbf16>, vector<32x32xbf16>, vector<8x32xf32> -> vector<8x32xf32>
      %106 = arith.truncf %105 : vector<8x32xf32> to vector<8x32xbf16>
      %c0_69 = arith.constant 0 : index
      %c0_70 = arith.constant 0 : index
      %107 = vector.load %arg11[%c0_69, %c0_70] : memref<8x32xbf16, #tpu.memory_space<vmem>>, vector<8x32xbf16>
      tpu.vector_store %arg11[%c0_69, %c0_70], %106 {strides = array<i32>} : memref<8x32xbf16, #tpu.memory_space<vmem>>, vector<8x32xbf16>,
      %c0_71 = arith.constant 0 : index
      %c0_72 = arith.constant 0 : index
      %c0_73 = arith.constant 0 : index
      %108 = vector.load %arg4[%c0_71, %c0_72, %c0_73] : memref<1x8x32xbf16, #tpu.memory_space<vmem>>, vector<1x8x32xbf16>
      %109 = vector.shape_cast %108 : vector<1x8x32xbf16> to vector<8x32xbf16>
      %c0_74 = arith.constant 0 : index
      %c0_75 = arith.constant 0 : index
      %110 = vector.load %arg7[%c0_74, %c0_75] : memref<32x32xbf16, #tpu.memory_space<vmem>>, vector<32x32xbf16>
      %cst_76 = arith.constant dense<0.000000e+00> : vector<8x32xf32>
      %111 = tpu.matmul %109, %110, %cst_76 {dimension_numbers = #tpu.dot_dimension_numbers<[1], [0], [0], [1], [0, 0, 1, 1], [], []>} : vector<8x32xbf16>, vector<32x32xbf16>, vector<8x32xf32> -> vector<8x32xf32>
      %112 = arith.truncf %111 : vector<8x32xf32> to vector<8x32xbf16>
      %c0_77 = arith.constant 0 : index
      %c0_78 = arith.constant 0 : index
      %113 = vector.load %arg12[%c0_77, %c0_78] : memref<8x32xbf16, #tpu.memory_space<vmem>>, vector<8x32xbf16>
      tpu.vector_store %arg12[%c0_77, %c0_78], %112 {strides = array<i32>} : memref<8x32xbf16, #tpu.memory_space<vmem>>, vector<8x32xbf16>,
    } else {
    }
    %c0 = arith.constant 0 : index
    %c0_1 = arith.constant 0 : index
    %c0_2 = arith.constant 0 : index
    %3 = vector.load %arg2[%c0, %c0_1, %c0_2] : memref<1x8x32xbf16, #tpu.memory_space<vmem>>, vector<1x8x32xbf16>
    %4 = vector.shape_cast %3 : vector<1x8x32xbf16> to vector<8x32xbf16>
    %c0_3 = arith.constant 0 : index
    %c0_4 = arith.constant 0 : index
    %5 = vector.load %arg5[%c0_3, %c0_4] : memref<32x32xbf16, #tpu.memory_space<vmem>>, vector<32x32xbf16>
    %cst = arith.constant dense<0.000000e+00> : vector<8x32xf32>
    %6 = tpu.matmul %4, %5, %cst {dimension_numbers = #tpu.dot_dimension_numbers<[1], [0], [0], [1], [0, 0, 1, 1], [], []>} : vector<8x32xbf16>, vector<32x32xbf16>, vector<8x32xf32> -> vector<8x32xf32>
    %7 = arith.truncf %6 : vector<8x32xf32> to vector<8x32xbf16>
    %8 = vector.extract_strided_slice %7 {offsets = [0, 0], sizes = [8, 8], strides = [1, 1]} : vector<8x32xbf16> to vector<8x8xbf16>
    %c0_5 = arith.constant 0 : index
    %c0_6 = arith.constant 0 : index
    %9 = vector.load %arg11[%c0_5, %c0_6] : memref<8x32xbf16, #tpu.memory_space<vmem>>, vector<8x8xbf16>
    %c0_7 = arith.constant 0 : index
    %c0_8 = arith.constant 0 : index
    %10 = vector.load %arg12[%c0_7, %c0_8] : memref<8x32xbf16, #tpu.memory_space<vmem>>, vector<8x8xbf16>
    %cst_9 = arith.constant dense<0.000000e+00> : vector<8x8xf32>
    %11 = tpu.matmul %8, %9, %cst_9 {dimension_numbers = #tpu.dot_dimension_numbers<[1], [1], [0], [0], [0, 0, 1, 0], [], []>} : vector<8x8xbf16>, vector<8x8xbf16>, vector<8x8xf32> -> vector<8x8xf32>
    %cst_10 = arith.constant dense<0xFF800000> : vector<8xf32>
    %12 = vector.multi_reduction <maximumf>, %11, %cst_10 [1] : vector<8x8xf32> to vector<8xf32>
    %13 = vector.shape_cast %12 : vector<8xf32> to vector<8x1xf32>
    %14 = vector.broadcast %13 : vector<8x1xf32> to vector<8x8xf32>
    %15 = arith.subf %11, %14 : vector<8x8xf32>
    %16 = math.exp %15 : vector<8x8xf32>
    %cst_11 = arith.constant dense<0.000000e+00> : vector<8xf32>
    %17 = vector.multi_reduction <add>, %16, %cst_11 [1] : vector<8x8xf32> to vector<8xf32>
    %18 = vector.shape_cast %17 : vector<8xf32> to vector<8x1xf32>
    %19 = tpu.reciprocal %18 {approx = true} : vector<8x1xf32> -> vector<8x1xf32>
    %20 = vector.broadcast %19 : vector<8x1xf32> to vector<8x8xf32>
    %21 = arith.mulf %16, %20 : vector<8x8xf32>
    %22 = arith.truncf %21 : vector<8x8xf32> to vector<8x8xbf16>
    %c0_12 = arith.constant 0 : index
    %c0_13 = arith.constant 0 : index
    %c0_14 = arith.constant 0 : index
    %c0_15 = arith.constant 0 : index
    %23 = vector.load %arg10[%c0_12, %c0_13, %c0_14, %c0_15] : memref<1x4x8x8xbf16, #tpu.memory_space<vmem>>, vector<1x1x8x8xbf16>
    %24 = vector.shape_cast %23 : vector<1x1x8x8xbf16> to vector<8x8xbf16>
    %25 = vector.shape_cast %22 : vector<8x8xbf16> to vector<1x1x8x8xbf16>
    tpu.vector_store %arg10[%c0_12, %c0_13, %c0_14, %c0_15], %25 {strides = array<i32>} : memref<1x4x8x8xbf16, #tpu.memory_space<vmem>>, vector<1x1x8x8xbf16>,
    %26 = arith.truncf %21 : vector<8x8xf32> to vector<8x8xbf16>
    %cst_16 = arith.constant dense<0.000000e+00> : vector<8x8xf32>
    %27 = tpu.matmul %26, %10, %cst_16 {dimension_numbers = #tpu.dot_dimension_numbers<[1], [0], [0], [1], [0, 0, 1, 1], [], []>} : vector<8x8xbf16>, vector<8x8xbf16>, vector<8x8xf32> -> vector<8x8xf32>
    %28 = arith.truncf %27 : vector<8x8xf32> to vector<8x8xbf16>
    %c0_17 = arith.constant 0 : index
    %c0_18 = arith.constant 0 : index
    %29 = vector.load %arg13[%c0_17, %c0_18] : memref<8x32xbf16, #tpu.memory_space<vmem>>, vector<8x8xbf16>
    tpu.vector_store %arg13[%c0_17, %c0_18], %28 {strides = array<i32>} : memref<8x32xbf16, #tpu.memory_space<vmem>>, vector<8x8xbf16>,
    %30 = vector.extract_strided_slice %7 {offsets = [0, 8], sizes = [8, 8], strides = [1, 1]} : vector<8x32xbf16> to vector<8x8xbf16>
    %c0_19 = arith.constant 0 : index
    %c8 = arith.constant 8 : index
    %31 = vector.load %arg11[%c0_19, %c8] : memref<8x32xbf16, #tpu.memory_space<vmem>>, vector<8x8xbf16>
    %c0_20 = arith.constant 0 : index
    %c8_21 = arith.constant 8 : index
    %32 = vector.load %arg12[%c0_20, %c8_21] : memref<8x32xbf16, #tpu.memory_space<vmem>>, vector<8x8xbf16>
    %cst_22 = arith.constant dense<0.000000e+00> : vector<8x8xf32>
    %33 = tpu.matmul %30, %31, %cst_22 {dimension_numbers = #tpu.dot_dimension_numbers<[1], [1], [0], [0], [0, 0, 1, 0], [], []>} : vector<8x8xbf16>, vector<8x8xbf16>, vector<8x8xf32> -> vector<8x8xf32>
    %cst_23 = arith.constant dense<0xFF800000> : vector<8xf32>
    %34 = vector.multi_reduction <maximumf>, %33, %cst_23 [1] : vector<8x8xf32> to vector<8xf32>
    %35 = vector.shape_cast %34 : vector<8xf32> to vector<8x1xf32>
    %36 = vector.broadcast %35 : vector<8x1xf32> to vector<8x8xf32>
    %37 = arith.subf %33, %36 : vector<8x8xf32>
    %38 = math.exp %37 : vector<8x8xf32>
    %cst_24 = arith.constant dense<0.000000e+00> : vector<8xf32>
    %39 = vector.multi_reduction <add>, %38, %cst_24 [1] : vector<8x8xf32> to vector<8xf32>
    %40 = vector.shape_cast %39 : vector<8xf32> to vector<8x1xf32>
    %41 = tpu.reciprocal %40 {approx = true} : vector<8x1xf32> -> vector<8x1xf32>
    %42 = vector.broadcast %41 : vector<8x1xf32> to vector<8x8xf32>
    %43 = arith.mulf %38, %42 : vector<8x8xf32>
    %44 = arith.truncf %43 : vector<8x8xf32> to vector<8x8xbf16>
    %c0_25 = arith.constant 0 : index
    %c1 = arith.constant 1 : index
    %c0_26 = arith.constant 0 : index
    %c0_27 = arith.constant 0 : index
    %45 = vector.load %arg10[%c0_25, %c1, %c0_26, %c0_27] : memref<1x4x8x8xbf16, #tpu.memory_space<vmem>>, vector<1x1x8x8xbf16>
    %46 = vector.shape_cast %45 : vector<1x1x8x8xbf16> to vector<8x8xbf16>
    %47 = vector.shape_cast %44 : vector<8x8xbf16> to vector<1x1x8x8xbf16>
    tpu.vector_store %arg10[%c0_25, %c1, %c0_26, %c0_27], %47 {strides = array<i32>} : memref<1x4x8x8xbf16, #tpu.memory_space<vmem>>, vector<1x1x8x8xbf16>,
    %48 = arith.truncf %43 : vector<8x8xf32> to vector<8x8xbf16>
    %cst_28 = arith.constant dense<0.000000e+00> : vector<8x8xf32>
    %49 = tpu.matmul %48, %32, %cst_28 {dimension_numbers = #tpu.dot_dimension_numbers<[1], [0], [0], [1], [0, 0, 1, 1], [], []>} : vector<8x8xbf16>, vector<8x8xbf16>, vector<8x8xf32> -> vector<8x8xf32>
    %50 = arith.truncf %49 : vector<8x8xf32> to vector<8x8xbf16>
    %c0_29 = arith.constant 0 : index
    %c8_30 = arith.constant 8 : index
    %51 = vector.load %arg13[%c0_29, %c8_30] : memref<8x32xbf16, #tpu.memory_space<vmem>>, vector<8x8xbf16>
    tpu.vector_store %arg13[%c0_29, %c8_30], %50 {strides = array<i32>} : memref<8x32xbf16, #tpu.memory_space<vmem>>, vector<8x8xbf16>,
    %52 = vector.extract_strided_slice %7 {offsets = [0, 16], sizes = [8, 8], strides = [1, 1]} : vector<8x32xbf16> to vector<8x8xbf16>
    %c0_31 = arith.constant 0 : index
    %c16 = arith.constant 16 : index
    %53 = vector.load %arg11[%c0_31, %c16] : memref<8x32xbf16, #tpu.memory_space<vmem>>, vector<8x8xbf16>
    %c0_32 = arith.constant 0 : index
    %c16_33 = arith.constant 16 : index
    %54 = vector.load %arg12[%c0_32, %c16_33] : memref<8x32xbf16, #tpu.memory_space<vmem>>, vector<8x8xbf16>
    %cst_34 = arith.constant dense<0.000000e+00> : vector<8x8xf32>
    %55 = tpu.matmul %52, %53, %cst_34 {dimension_numbers = #tpu.dot_dimension_numbers<[1], [1], [0], [0], [0, 0, 1, 0], [], []>} : vector<8x8xbf16>, vector<8x8xbf16>, vector<8x8xf32> -> vector<8x8xf32>
    %cst_35 = arith.constant dense<0xFF800000> : vector<8xf32>
    %56 = vector.multi_reduction <maximumf>, %55, %cst_35 [1] : vector<8x8xf32> to vector<8xf32>
    %57 = vector.shape_cast %56 : vector<8xf32> to vector<8x1xf32>
    %58 = vector.broadcast %57 : vector<8x1xf32> to vector<8x8xf32>
    %59 = arith.subf %55, %58 : vector<8x8xf32>
    %60 = math.exp %59 : vector<8x8xf32>
    %cst_36 = arith.constant dense<0.000000e+00> : vector<8xf32>
    %61 = vector.multi_reduction <add>, %60, %cst_36 [1] : vector<8x8xf32> to vector<8xf32>
    %62 = vector.shape_cast %61 : vector<8xf32> to vector<8x1xf32>
    %63 = tpu.reciprocal %62 {approx = true} : vector<8x1xf32> -> vector<8x1xf32>
    %64 = vector.broadcast %63 : vector<8x1xf32> to vector<8x8xf32>
    %65 = arith.mulf %60, %64 : vector<8x8xf32>
    %66 = arith.truncf %65 : vector<8x8xf32> to vector<8x8xbf16>
    %c0_37 = arith.constant 0 : index
    %c2 = arith.constant 2 : index
    %c0_38 = arith.constant 0 : index
    %c0_39 = arith.constant 0 : index
    %67 = vector.load %arg10[%c0_37, %c2, %c0_38, %c0_39] : memref<1x4x8x8xbf16, #tpu.memory_space<vmem>>, vector<1x1x8x8xbf16>
    %68 = vector.shape_cast %67 : vector<1x1x8x8xbf16> to vector<8x8xbf16>
    %69 = vector.shape_cast %66 : vector<8x8xbf16> to vector<1x1x8x8xbf16>
    tpu.vector_store %arg10[%c0_37, %c2, %c0_38, %c0_39], %69 {strides = array<i32>} : memref<1x4x8x8xbf16, #tpu.memory_space<vmem>>, vector<1x1x8x8xbf16>,
    %70 = arith.truncf %65 : vector<8x8xf32> to vector<8x8xbf16>
    %cst_40 = arith.constant dense<0.000000e+00> : vector<8x8xf32>
    %71 = tpu.matmul %70, %54, %cst_40 {dimension_numbers = #tpu.dot_dimension_numbers<[1], [0], [0], [1], [0, 0, 1, 1], [], []>} : vector<8x8xbf16>, vector<8x8xbf16>, vector<8x8xf32> -> vector<8x8xf32>
    %72 = arith.truncf %71 : vector<8x8xf32> to vector<8x8xbf16>
    %c0_41 = arith.constant 0 : index
    %c16_42 = arith.constant 16 : index
    %73 = vector.load %arg13[%c0_41, %c16_42] : memref<8x32xbf16, #tpu.memory_space<vmem>>, vector<8x8xbf16>
    tpu.vector_store %arg13[%c0_41, %c16_42], %72 {strides = array<i32>} : memref<8x32xbf16, #tpu.memory_space<vmem>>, vector<8x8xbf16>,
    %74 = vector.extract_strided_slice %7 {offsets = [0, 24], sizes = [8, 8], strides = [1, 1]} : vector<8x32xbf16> to vector<8x8xbf16>
    %c0_43 = arith.constant 0 : index
    %c24 = arith.constant 24 : index
    %75 = vector.load %arg11[%c0_43, %c24] : memref<8x32xbf16, #tpu.memory_space<vmem>>, vector<8x8xbf16>
    %c0_44 = arith.constant 0 : index
    %c24_45 = arith.constant 24 : index
    %76 = vector.load %arg12[%c0_44, %c24_45] : memref<8x32xbf16, #tpu.memory_space<vmem>>, vector<8x8xbf16>
    %cst_46 = arith.constant dense<0.000000e+00> : vector<8x8xf32>
    %77 = tpu.matmul %74, %75, %cst_46 {dimension_numbers = #tpu.dot_dimension_numbers<[1], [1], [0], [0], [0, 0, 1, 0], [], []>} : vector<8x8xbf16>, vector<8x8xbf16>, vector<8x8xf32> -> vector<8x8xf32>
    %cst_47 = arith.constant dense<0xFF800000> : vector<8xf32>
    %78 = vector.multi_reduction <maximumf>, %77, %cst_47 [1] : vector<8x8xf32> to vector<8xf32>
    %79 = vector.shape_cast %78 : vector<8xf32> to vector<8x1xf32>
    %80 = vector.broadcast %79 : vector<8x1xf32> to vector<8x8xf32>
    %81 = arith.subf %77, %80 : vector<8x8xf32>
    %82 = math.exp %81 : vector<8x8xf32>
    %cst_48 = arith.constant dense<0.000000e+00> : vector<8xf32>
    %83 = vector.multi_reduction <add>, %82, %cst_48 [1] : vector<8x8xf32> to vector<8xf32>
    %84 = vector.shape_cast %83 : vector<8xf32> to vector<8x1xf32>
    %85 = tpu.reciprocal %84 {approx = true} : vector<8x1xf32> -> vector<8x1xf32>
    %86 = vector.broadcast %85 : vector<8x1xf32> to vector<8x8xf32>
    %87 = arith.mulf %82, %86 : vector<8x8xf32>
    %88 = arith.truncf %87 : vector<8x8xf32> to vector<8x8xbf16>
    %c0_49 = arith.constant 0 : index
    %c3 = arith.constant 3 : index
    %c0_50 = arith.constant 0 : index
    %c0_51 = arith.constant 0 : index
    %89 = vector.load %arg10[%c0_49, %c3, %c0_50, %c0_51] : memref<1x4x8x8xbf16, #tpu.memory_space<vmem>>, vector<1x1x8x8xbf16>
    %90 = vector.shape_cast %89 : vector<1x1x8x8xbf16> to vector<8x8xbf16>
    %91 = vector.shape_cast %88 : vector<8x8xbf16> to vector<1x1x8x8xbf16>
    tpu.vector_store %arg10[%c0_49, %c3, %c0_50, %c0_51], %91 {strides = array<i32>} : memref<1x4x8x8xbf16, #tpu.memory_space<vmem>>, vector<1x1x8x8xbf16>,
    %92 = arith.truncf %87 : vector<8x8xf32> to vector<8x8xbf16>
    %cst_52 = arith.constant dense<0.000000e+00> : vector<8x8xf32>
    %93 = tpu.matmul %92, %76, %cst_52 {dimension_numbers = #tpu.dot_dimension_numbers<[1], [0], [0], [1], [0, 0, 1, 1], [], []>} : vector<8x8xbf16>, vector<8x8xbf16>, vector<8x8xf32> -> vector<8x8xf32>
    %94 = arith.truncf %93 : vector<8x8xf32> to vector<8x8xbf16>
    %c0_53 = arith.constant 0 : index
    %c24_54 = arith.constant 24 : index
    %95 = vector.load %arg13[%c0_53, %c24_54] : memref<8x32xbf16, #tpu.memory_space<vmem>>, vector<8x8xbf16>
    tpu.vector_store %arg13[%c0_53, %c24_54], %94 {strides = array<i32>} : memref<8x32xbf16, #tpu.memory_space<vmem>>, vector<8x8xbf16>,
    %c0_55 = arith.constant 0 : index
    %c0_56 = arith.constant 0 : index
    %96 = vector.load %arg13[%c0_55, %c0_56] : memref<8x32xbf16, #tpu.memory_space<vmem>>, vector<8x32xbf16>
    %c0_57 = arith.constant 0 : index
    %c0_58 = arith.constant 0 : index
    %97 = vector.load %arg8[%c0_57, %c0_58] : memref<32x32xbf16, #tpu.memory_space<vmem>>, vector<32x32xbf16>
    %cst_59 = arith.constant dense<0.000000e+00> : vector<8x32xf32>
    %98 = tpu.matmul %96, %97, %cst_59 {dimension_numbers = #tpu.dot_dimension_numbers<[1], [0], [0], [1], [0, 0, 1, 1], [], []>} : vector<8x32xbf16>, vector<32x32xbf16>, vector<8x32xf32> -> vector<8x32xf32>
    %c0_60 = arith.constant 0 : index
    %c0_61 = arith.constant 0 : index
    %c0_62 = arith.constant 0 : index
    %99 = vector.load %arg9[%c0_60, %c0_61, %c0_62] : memref<1x8x32xf32, #tpu.memory_space<vmem>>, vector<1x8x32xf32>
    %100 = vector.shape_cast %99 : vector<1x8x32xf32> to vector<8x32xf32>
    %101 = vector.shape_cast %98 : vector<8x32xf32> to vector<1x8x32xf32>
    tpu.vector_store %arg9[%c0_60, %c0_61, %c0_62], %101 {strides = array<i32>} : memref<1x8x32xf32, #tpu.memory_space<vmem>>, vector<1x8x32xf32>,
    return
  }
  func.func @transform_0(%arg0: i32, %arg1: i32) -> (i32, i32, i32) {
    %c0_i32 = arith.constant 0 : i32
    %c0_i32_0 = arith.constant 0 : i32
    return %arg0, %arg1, %c0_i32 : i32, i32, i32
  }
  func.func @transform_1(%arg0: i32, %arg1: i32) -> (i32, i32, i32) {
    %c0_i32 = arith.constant 0 : i32
    %c0_i32_0 = arith.constant 0 : i32
    %c0_i32_1 = arith.constant 0 : i32
    return %arg0, %c0_i32, %c0_i32_0 : i32, i32, i32
  }
  func.func @transform_2(%arg0: i32, %arg1: i32) -> (i32, i32, i32) {
    %c0_i32 = arith.constant 0 : i32
    %c0_i32_0 = arith.constant 0 : i32
    %c0_i32_1 = arith.constant 0 : i32
    return %arg0, %c0_i32, %c0_i32_0 : i32, i32, i32
  }
  func.func @transform_3(%arg0: i32, %arg1: i32) -> (i32, i32) {
    %c0_i32 = arith.constant 0 : i32
    %c0_i32_0 = arith.constant 0 : i32
    %c0_i32_1 = arith.constant 0 : i32
    return %c0_i32, %c0_i32_0 : i32, i32
  }
  func.func @transform_4(%arg0: i32, %arg1: i32) -> (i32, i32) {
    %c0_i32 = arith.constant 0 : i32
    %c0_i32_0 = arith.constant 0 : i32
    %c0_i32_1 = arith.constant 0 : i32
    return %c0_i32, %c0_i32_0 : i32, i32
  }
  func.func @transform_5(%arg0: i32, %arg1: i32) -> (i32, i32) {
    %c0_i32 = arith.constant 0 : i32
    %c0_i32_0 = arith.constant 0 : i32
    %c0_i32_1 = arith.constant 0 : i32
    return %c0_i32, %c0_i32_0 : i32, i32
  }
  func.func @transform_6(%arg0: i32, %arg1: i32) -> (i32, i32) {
    %c0_i32 = arith.constant 0 : i32
    %c0_i32_0 = arith.constant 0 : i32
    %c0_i32_1 = arith.constant 0 : i32
    return %c0_i32, %c0_i32_0 : i32, i32
  }
  func.func @transform_7(%arg0: i32, %arg1: i32) -> (i32, i32, i32) {
    %c0_i32 = arith.constant 0 : i32
    %c0_i32_0 = arith.constant 0 : i32
    return %arg0, %arg1, %c0_i32 : i32, i32, i32
  }
  func.func @transform_8(%arg0: i32, %arg1: i32) -> (i32, i32, i32, i32) {
    %c0_i32 = arith.constant 0 : i32
    %c0_i32_0 = arith.constant 0 : i32
    %c0_i32_1 = arith.constant 0 : i32
    return %arg0, %c0_i32, %arg1, %c0_i32_0 : i32, i32, i32, i32
  }
}

</mosaic_0001>

<llo_original>
// kernel: tpu_custom_call.1
$region0: #{tpu_custom_call.1}
  #allocation0 [shape = 'u32[]', space=smem, size = 0x4, offset = 0x4, fixed_abs, tag = 'smem constant byte address 0x4 - core index']
  #allocation1 [shape = 'u32[144,128]{1,0:T(1,128)}', space=vmem, size = 0x12000, scoped, tag = 'internal scratch']
  %s0 = inlined_call_operand.hbm [shape: f32[8,128], index: 0, kind: input, shape index: {}]
  %s1 = inlined_call_operand.hbm [shape: f32[8,128], index: 1, kind: output, shape index: {}]
  %s2 = sld [smem:[#allocation0]]
  $region18: #{tpu_custom_call.1} parent=0
    _
  %s4 = ssub.s32 1, %s2
  %s5 = scalar_select 0, %s4, %s2
  $region1: #{tpu_custom_call.1} parent=0
    #allocation2 [shape = 'u8[4096]{0}', space=vmem, size = 0x1000, scoped, tag = 'input window, operand 0, single buffered']
    #allocation3 [shape = 's32[1]{0}', space=sflag, size = 0x4, scoped, tag = 'scoped memory for tpu_custom_call.1']
    #allocation4 [shape = 's32[1]{0}', space=sflag, size = 0x4, scoped, tag = 'scoped memory for tpu_custom_call.1']
    #allocation5 [shape = 'u8[4096]{0}', space=vmem, size = 0x1000, scoped, tag = 'output window, operand 0, single buffered']
    %6 = vsyncpa [#allocation3], 0
    %7 = vsyncpa [#allocation4], 0
    // Predicated region
    $region2: #{tpu_custom_call.1} parent=1 // pred_check
      _
    $region3: #{tpu_custom_call.1} parent=1 // pred_check_branch
      %9 = sbr.rel (0) target = $region5
    $region4: #{tpu_custom_call.1} parent=1 // pred_region
      %s11 = ssub.s32 128, 128
      %12 = vsyncadd [#allocation3], %s11
      %s14 = sshll.u32 [#allocation2], 4
      %s15 = int_to_ptr.vmem [resolvable:$true] %s14
      %17 = dma.hbm_to_vmem [thread:$0]  %s0, 128, %s15, [#allocation3]
    $region5: #{tpu_custom_call.1} parent=1 // pred_fallthru
      _
    // Predicated region
    $region6: #{tpu_custom_call.1} parent=1 // pred_check
      _
    $region7: #{tpu_custom_call.1} parent=1 // pred_check_branch
      %19 = sbr.rel (0) target = $region9
    $region8: #{tpu_custom_call.1} parent=1 // pred_region
      %20 = dma.done [#allocation3], 128
    $region9: #{tpu_custom_call.1} parent=1 // pred_fallthru
      _
    %v21 = vld [vmem:[#allocation2] sm:$0xff]
    %22 = vst [vmem:[#allocation5] sm:$0xff] %v21
    // Predicated region
    $region10: #{tpu_custom_call.1} parent=1 // pred_check
      _
    $region11: #{tpu_custom_call.1} parent=1 // pred_check_branch
      %24 = sbr.rel (0) target = $region13
    $region12: #{tpu_custom_call.1} parent=1 // pred_region
      %s26 = ssub.s32 128, 128
      %27 = vsyncadd [#allocation4], %s26
      %s29 = sshll.u32 [#allocation5], 4
      %s30 = int_to_ptr.vmem [resolvable:$true] %s29
      %32 = dma.vmem_to_hbm [thread:$0]  %s30, 128, %s1, [#allocation4]
    $region13: #{tpu_custom_call.1} parent=1 // pred_fallthru
      _
    // Predicated region
    $region14: #{tpu_custom_call.1} parent=1 // pred_check
      _
    $region15: #{tpu_custom_call.1} parent=1 // pred_check_branch
      %34 = sbr.rel (0) target = $region17
    $region16: #{tpu_custom_call.1} parent=1 // pred_region
      %35 = dma.done [#allocation4], 128
    $region17: #{tpu_custom_call.1} parent=1 // pred_fallthru
      _
    %36 = vsyncpa [#allocation3], 1
    %37 = vsyncpa [#allocation4], 1

// kernel: tpu_custom_call.1
$region0: #{tpu_custom_call.1}
  #allocation0 [shape = 'u32[]', space=smem, size = 0x4, offset = 0x4, fixed_abs, tag = 'smem constant byte address 0x4 - core index']
  #allocation1 [shape = 'u32[144,128]{1,0:T(1,128)}', space=vmem, size = 0x12000, scoped, tag = 'internal scratch']
  #allocation2 [shape = 'bf16[8,32]{1,0:T(8,128)(2,1)}', space=vmem, size = 0x800, scoped, tag = 'scratch operand']
  #allocation3 [shape = 'bf16[8,32]{1,0:T(8,128)(2,1)}', space=vmem, size = 0x800, scoped, tag = 'scratch operand']
  #allocation4 [shape = 'bf16[8,32]{1,0:T(8,128)(2,1)}', space=vmem, size = 0x800, scoped, tag = 'scratch operand']
  %s0 = inlined_call_operand.hbm [shape: bf16[2,8,32], index: 0, kind: input, shape index: {}]
  %s1 = inlined_call_operand.hbm [shape: bf16[2,8,32], index: 1, kind: input, shape index: {}]
  %s2 = inlined_call_operand.hbm [shape: bf16[2,8,32], index: 2, kind: input, shape index: {}]
  %s3 = inlined_call_operand.hbm [shape: bf16[32,32], index: 3, kind: input, shape index: {}]
  %s4 = inlined_call_operand.hbm [shape: bf16[32,32], index: 4, kind: input, shape index: {}]
  %s5 = inlined_call_operand.hbm [shape: bf16[32,32], index: 5, kind: input, shape index: {}]
  %s6 = inlined_call_operand.hbm [shape: bf16[32,32], index: 6, kind: input, shape index: {}]
  %s7 = inlined_call_operand.hbm [shape: f32[2,8,32], index: 7, kind: output, shape index: {0}]
  %s8 = inlined_call_operand.hbm [shape: bf16[2,4,8,8], index: 8, kind: output, shape index: {1}]
  %9 = xla_tuple %s7, %s8
  %s10 = sld [smem:[#allocation0]]
  $region101: #{tpu_custom_call.1} parent=0
    _
  %s12 = ssub.s32 1, %s10
  %s13 = scalar_select 0, %s12, %s10
  $region1: #{tpu_custom_call.1} parent=0
    #allocation5 [shape = 'u8[4096]{0}', space=vmem, size = 0x1000, scoped, tag = 'input window, operand 0']
    #allocation6 [shape = 's32[2]{0}', space=sflag, size = 0x8, scoped, tag = 'scoped memory for tpu_custom_call.1']
    #allocation7 [shape = 's32[2]{0}', space=sflag, size = 0x8, scoped, tag = 'scoped memory for tpu_custom_call.1']
    #allocation8 [shape = 'u8[4096]{0}', space=vmem, size = 0x1000, scoped, tag = 'input window, operand 1']
    #allocation9 [shape = 's32[2]{0}', space=sflag, size = 0x8, scoped, tag = 'scoped memory for tpu_custom_call.1']
    #allocation10 [shape = 'u8[4096]{0}', space=vmem, size = 0x1000, scoped, tag = 'input window, operand 2']
    #allocation11 [shape = 'u8[8192]{0}', space=vmem, size = 0x2000, scoped, tag = 'input window, operand 3, single buffered']
    #allocation12 [shape = 's32[1]{0}', space=sflag, size = 0x4, scoped, tag = 'scoped memory for tpu_custom_call.1']
    #allocation13 [shape = 'u8[8192]{0}', space=vmem, size = 0x2000, scoped, tag = 'input window, operand 4, single buffered']
    #allocation14 [shape = 'u8[8192]{0}', space=vmem, size = 0x2000, scoped, tag = 'input window, operand 5, single buffered']
    #allocation15 [shape = 's32[1]{0}', space=sflag, size = 0x4, scoped, tag = 'scoped memory for tpu_custom_call.1']
    #allocation16 [shape = 'u8[8192]{0}', space=vmem, size = 0x2000, scoped, tag = 'input window, operand 6, single buffered']
    #allocation17 [shape = 'u8[8192]{0}', space=vmem, size = 0x2000, scoped, tag = 'output window, operand 0']
    #allocation18 [shape = 'u8[16384]{0}', space=vmem, size = 0x4000, scoped, tag = 'output window, operand 1']
    #allocation19 [shape = 's32[2]{0}', space=sflag, size = 0x8, scoped, tag = 'scoped memory for tpu_custom_call.1']
    %14 = vsyncpa [#allocation6], 0
    %s15 = scalar_lea.sflag [#allocation6], 1
    %16 = vsyncpa %s15, 0
    %17 = vsyncpa [#allocation9], 0
    %s18 = scalar_lea.sflag [#allocation9], 1
    %19 = vsyncpa %s18, 0
    %20 = vsyncpa [#allocation12], 0
    %21 = vsyncpa [#allocation15], 0
    %22 = vsyncpa [#allocation7], 0
    %s23 = scalar_lea.sflag [#allocation7], 1
    %24 = vsyncpa %s23, 0
    %25 = vsyncpa [#allocation19], 0
    %s26 = scalar_lea.sflag [#allocation19], 1
    %27 = vsyncpa %s26, 0
    loop: start=0, step=1, limit=4
    $region2: #{tpu_custom_call.1} parent=1 // loop_pre_header
      _
    $region3: #{tpu_custom_call.1} parent=1 // loop_header
      %s29 = sphi 0, %s33
      %p30 = scmp.ge.s32.totalorder %s29, 4
      %s36 = sphi 0, %s48
      %s37 = sphi 0, %s44
      %s38 = sphi 0, %s36
      %s39 = sphi 0, %s37
      %s40 = sphi 0, %s38
      %s41 = sphi 0, %s39
      %s53 = sphi 0, %s55
      %s56 = sphi 0, %s53
      %s57 = sphi 0, %s56
      %s73 = sphi 0, %s57
      %s79 = sphi 0, %s81
      %s82 = sphi 0, %s79
      %s83 = sphi 0, %s82
      %s99 = sphi 0, %s83
      %s105 = sphi 0, %s107
      %s108 = sphi 0, %s105
      %s109 = sphi 0, %s108
      %s125 = sphi 0, %s109
      %s129 = sphi 0, %s129
      %s131 = sphi 0, %s129
      %s132 = sphi 0, %s131
      %s146 = sphi 0, %s132
      %s150 = sphi 0, %s150
      %s152 = sphi 0, %s150
      %s153 = sphi 0, %s152
      %s167 = sphi 0, %s153
      %s171 = sphi 0, %s171
      %s173 = sphi 0, %s171
      %s174 = sphi 0, %s173
      %s188 = sphi 0, %s174
      %s192 = sphi 0, %s192
      %s194 = sphi 0, %s192
      %s195 = sphi 0, %s194
      %s209 = sphi 0, %s195
      %s217 = sphi 0, %s219
      %s220 = sphi 0, %s217
      %s221 = sphi 0, %s220
      %s237 = sphi 0, %s221
      %s245 = sphi 0, %s247
      %s248 = sphi 0, %s245
      %s249 = sphi 0, %s248
      %s265 = sphi 0, %s249
    $region4: #{tpu_custom_call.1} parent=1 // loop_header_branch
      %32 = sbr.rel (%p30) target = $region8
    $region5: #{tpu_custom_call.1} parent=1 // loop_body
      %s34 = ssub.s32 %s29, 1
      %s35 = ssub.s32 %s29, 2
      %s42 = sadd.s32 1, %s37
      %p43 = scmp.ge.s32.totalorder %s42, 1
      %s44 = scalar_select %p43, 0, %s42
      %s45 = sadd.s32 1, %s36
      %s46 = scalar_select %p43, %s45, %s36
      %p47 = scmp.ge.s32.totalorder %s46, 2
      %s48 = scalar_select %p47, 0, %s46
      %s49 = ssub.s32 %s36, %s48
      %s50 = ssub.s32 %s37, %s44
      %s51 = sor.u32 %s49, %s50
      %p52 = scmp.eq.s32.totalorder %s51, 0
      %s54 = sadd.s32 %s53, 1
      %s55 = scalar_select %p52, %s53, %s54
      %p58 = pneg %p52
      %p59 = scmp.eq.s32.totalorder %s29, 1
      %p60 = por %p58, %p59
      %p61 = scmp.ne.s32.totalorder %s53, %s56
      %p62 = scmp.eq.s32.totalorder %s29, 0
      %p63 = por %p61, %p62
      %p64 = scmp.ne.s32.totalorder %s53, %s56
      %p65 = scmp.eq.s32.totalorder %s34, 1
      %p66 = por %p64, %p65
      %p67 = scmp.ne.s32.totalorder %s56, %s57
      %p68 = scmp.eq.s32.totalorder %s34, 0
      %p69 = por %p67, %p68
      %p70 = scmp.ne.s32.totalorder %s56, %s57
      %p71 = scmp.eq.s32.totalorder %s35, 1
      %p72 = por %p70, %p71
      %p74 = scmp.ne.s32.totalorder %s57, %s73
      %p75 = scmp.eq.s32.totalorder %s35, 0
      %p76 = por %p74, %p75
      %s77 = ssub.s32 %s36, %s48
      %p78 = scmp.eq.s32.totalorder %s77, 0
      %s80 = sadd.s32 %s79, 1
      %s81 = scalar_select %p78, %s79, %s80
      %p84 = pneg %p78
      %p85 = scmp.eq.s32.totalorder %s29, 1
      %p86 = por %p84, %p85
      %p87 = scmp.ne.s32.totalorder %s79, %s82
      %p88 = scmp.eq.s32.totalorder %s29, 0
      %p89 = por %p87, %p88
      %p90 = scmp.ne.s32.totalorder %s79, %s82
      %p91 = scmp.eq.s32.totalorder %s34, 1
      %p92 = por %p90, %p91
      %p93 = scmp.ne.s32.totalorder %s82, %s83
      %p94 = scmp.eq.s32.totalorder %s34, 0
      %p95 = por %p93, %p94
      %p96 = scmp.ne.s32.totalorder %s82, %s83
      %p97 = scmp.eq.s32.totalorder %s35, 1
      %p98 = por %p96, %p97
      %p100 = scmp.ne.s32.totalorder %s83, %s99
      %p101 = scmp.eq.s32.totalorder %s35, 0
      %p102 = por %p100, %p101
      %s103 = ssub.s32 %s36, %s48
      %p104 = scmp.eq.s32.totalorder %s103, 0
      %s106 = sadd.s32 %s105, 1
      %s107 = scalar_select %p104, %s105, %s106
      %p110 = pneg %p104
      %p111 = scmp.eq.s32.totalorder %s29, 1
      %p112 = por %p110, %p111
      %p113 = scmp.ne.s32.totalorder %s105, %s108
      %p114 = scmp.eq.s32.totalorder %s29, 0
      %p115 = por %p113, %p114
      %p116 = scmp.ne.s32.totalorder %s105, %s108
      %p117 = scmp.eq.s32.totalorder %s34, 1
      %p118 = por %p116, %p117
      %p119 = scmp.ne.s32.totalorder %s108, %s109
      %p120 = scmp.eq.s32.totalorder %s34, 0
      %p121 = por %p119, %p120
      %p122 = scmp.ne.s32.totalorder %s108, %s109
      %p123 = scmp.eq.s32.totalorder %s35, 1
      %p124 = por %p122, %p123
      %p126 = scmp.ne.s32.totalorder %s109, %s125
      %p127 = scmp.eq.s32.totalorder %s35, 0
      %p128 = por %p126, %p127
      %s130 = sadd.s32 %s129, 1
      %p133 = scmp.eq.s32.totalorder %s29, 1
      %p134 = scmp.ne.s32.totalorder %s129, %s131
      %p135 = scmp.eq.s32.totalorder %s29, 0
      %p136 = por %p134, %p135
      %p137 = scmp.ne.s32.totalorder %s129, %s131
      %p138 = scmp.eq.s32.totalorder %s34, 1
      %p139 = por %p137, %p138
      %p140 = scmp.ne.s32.totalorder %s131, %s132
      %p141 = scmp.eq.s32.totalorder %s34, 0
      %p142 = por %p140, %p141
      %p143 = scmp.ne.s32.totalorder %s131, %s132
      %p144 = scmp.eq.s32.totalorder %s35, 1
      %p145 = por %p143, %p144
      %p147 = scmp.ne.s32.totalorder %s132, %s146
      %p148 = scmp.eq.s32.totalorder %s35, 0
      %p149 = por %p147, %p148
      %s151 = sadd.s32 %s150, 1
      %p154 = scmp.eq.s32.totalorder %s29, 1
      %p155 = scmp.ne.s32.totalorder %s150, %s152
      %p156 = scmp.eq.s32.totalorder %s29, 0
      %p157 = por %p155, %p156
      %p158 = scmp.ne.s32.totalorder %s150, %s152
      %p159 = scmp.eq.s32.totalorder %s34, 1
      %p160 = por %p158, %p159
      %p161 = scmp.ne.s32.totalorder %s152, %s153
      %p162 = scmp.eq.s32.totalorder %s34, 0
      %p163 = por %p161, %p162
      %p164 = scmp.ne.s32.totalorder %s152, %s153
      %p165 = scmp.eq.s32.totalorder %s35, 1
      %p166 = por %p164, %p165
      %p168 = scmp.ne.s32.totalorder %s153, %s167
      %p169 = scmp.eq.s32.totalorder %s35, 0
      %p170 = por %p168, %p169
      %s172 = sadd.s32 %s171, 1
      %p175 = scmp.eq.s32.totalorder %s29, 1
      %p176 = scmp.ne.s32.totalorder %s171, %s173
      %p177 = scmp.eq.s32.totalorder %s29, 0
      %p178 = por %p176, %p177
      %p179 = scmp.ne.s32.totalorder %s171, %s173
      %p180 = scmp.eq.s32.totalorder %s34, 1
      %p181 = por %p179, %p180
      %p182 = scmp.ne.s32.totalorder %s173, %s174
      %p183 = scmp.eq.s32.totalorder %s34, 0
      %p184 = por %p182, %p183
      %p185 = scmp.ne.s32.totalorder %s173, %s174
      %p186 = scmp.eq.s32.totalorder %s35, 1
      %p187 = por %p185, %p186
      %p189 = scmp.ne.s32.totalorder %s174, %s188
      %p190 = scmp.eq.s32.totalorder %s35, 0
      %p191 = por %p189, %p190
      %s193 = sadd.s32 %s192, 1
      %p196 = scmp.eq.s32.totalorder %s29, 1
      %p197 = scmp.ne.s32.totalorder %s192, %s194
      %p198 = scmp.eq.s32.totalorder %s29, 0
      %p199 = por %p197, %p198
      %p200 = scmp.ne.s32.totalorder %s192, %s194
      %p201 = scmp.eq.s32.totalorder %s34, 1
      %p202 = por %p200, %p201
      %p203 = scmp.ne.s32.totalorder %s194, %s195
      %p204 = scmp.eq.s32.totalorder %s34, 0
      %p205 = por %p203, %p204
      %p206 = scmp.ne.s32.totalorder %s194, %s195
      %p207 = scmp.eq.s32.totalorder %s35, 1
      %p208 = por %p206, %p207
      %p210 = scmp.ne.s32.totalorder %s195, %s209
      %p211 = scmp.eq.s32.totalorder %s35, 0
      %p212 = por %p210, %p211
      %s213 = ssub.s32 %s36, %s48
      %s214 = ssub.s32 %s37, %s44
      %s215 = sor.u32 %s213, %s214
      %p216 = scmp.eq.s32.totalorder %s215, 0
      %s218 = sadd.s32 %s217, 1
      %s219 = scalar_select %p216, %s217, %s218
      %p222 = pneg %p216
      %p223 = scmp.eq.s32.totalorder %s29, 1
      %p224 = por %p222, %p223
      %p225 = scmp.ne.s32.totalorder %s217, %s220
      %p226 = scmp.eq.s32.totalorder %s29, 0
      %p227 = por %p225, %p226
      %p228 = scmp.ne.s32.totalorder %s217, %s220
      %p229 = scmp.eq.s32.totalorder %s34, 1
      %p230 = por %p228, %p229
      %p231 = scmp.ne.s32.totalorder %s220, %s221
      %p232 = scmp.eq.s32.totalorder %s34, 0
      %p233 = por %p231, %p232
      %p234 = scmp.ne.s32.totalorder %s220, %s221
      %p235 = scmp.eq.s32.totalorder %s35, 1
      %p236 = por %p234, %p235
      %p238 = scmp.ne.s32.totalorder %s221, %s237
      %p239 = scmp.eq.s32.totalorder %s35, 0
      %p240 = por %p238, %p239
      %s241 = ssub.s32 %s36, %s48
      %s242 = ssub.s32 %s37, %s44
      %s243 = sor.u32 %s241, %s242
      %p244 = scmp.eq.s32.totalorder %s243, 0
      %s246 = sadd.s32 %s245, 1
      %s247 = scalar_select %p244, %s245, %s246
      %p250 = pneg %p244
      %p251 = scmp.eq.s32.totalorder %s29, 1
      %p252 = por %p250, %p251
      %p253 = scmp.ne.s32.totalorder %s245, %s248
      %p254 = scmp.eq.s32.totalorder %s29, 0
      %p255 = por %p253, %p254
      %p256 = scmp.ne.s32.totalorder %s245, %s248
      %p257 = scmp.eq.s32.totalorder %s34, 1
      %p258 = por %p256, %p257
      %p259 = scmp.ne.s32.totalorder %s248, %s249
      %p260 = scmp.eq.s32.totalorder %s34, 0
      %p261 = por %p259, %p260
      %p262 = scmp.ne.s32.totalorder %s248, %s249
      %p263 = scmp.eq.s32.totalorder %s35, 1
      %p264 = por %p262, %p263
      %p266 = scmp.ne.s32.totalorder %s249, %s265
      %p267 = scmp.eq.s32.totalorder %s35, 0
      %p268 = por %p266, %p267
      %p269 = scmp.le.s32.totalorder 1, %s29
      %p270 = scmp.lt.s32.totalorder %s29, 3
      %p271 = pnand %p269, %p270
      %p272 = pneg %p271
      // Predicated region
      $region9: #{tpu_custom_call.1} parent=5 // pred_check
        _
      $region10: #{tpu_custom_call.1} parent=5 // pred_check_branch
        %274 = sbr.rel (%p271) target = $region12
      $region11: #{tpu_custom_call.1} parent=5 // pred_region
        %s275 = ssub.s32 %s29, 1
        // Predicated region
        $region13: #{tpu_custom_call.1} parent=11 // pred_check
          %p276 = pneg %p142
        $region14: #{tpu_custom_call.1} parent=11 // pred_check_branch
          %278 = sbr.rel (%p276) target = $region16
        $region15: #{tpu_custom_call.1} parent=11 // pred_region
          %s280 = ssub.s32 256, 256
          %281 = vsyncadd [#allocation12], %s280
          %s282 = sshll.u32 [#allocation11], 4
          %s283 = int_to_ptr.vmem [resolvable:$true] %s282
          %288 = dma.hbm_to_vmem [thread:$0]  %s3, 256, %s283, [#allocation12], 64, 64, 4
        $region16: #{tpu_custom_call.1} parent=11 // pred_fallthru
          _
        // Predicated region
        $region17: #{tpu_custom_call.1} parent=11 // pred_check
          %p289 = pneg %p163
        $region18: #{tpu_custom_call.1} parent=11 // pred_check_branch
          %291 = sbr.rel (%p289) target = $region20
        $region19: #{tpu_custom_call.1} parent=11 // pred_region
          %s293 = ssub.s32 256, 256
          %294 = vsyncadd [#allocation12], %s293
          %s295 = sshll.u32 [#allocation13], 4
          %s296 = int_to_ptr.vmem [resolvable:$true] %s295
          %301 = dma.hbm_to_vmem [thread:$0]  %s4, 256, %s296, [#allocation12], 64, 64, 4
        $region20: #{tpu_custom_call.1} parent=11 // pred_fallthru
          _
        // Predicated region
        $region21: #{tpu_custom_call.1} parent=11 // pred_check
          %p302 = pneg %p184
        $region22: #{tpu_custom_call.1} parent=11 // pred_check_branch
          %304 = sbr.rel (%p302) target = $region24
        $region23: #{tpu_custom_call.1} parent=11 // pred_region
          %s306 = ssub.s32 256, 256
          %307 = vsyncadd [#allocation15], %s306
          %s308 = sshll.u32 [#allocation14], 4
          %s309 = int_to_ptr.vmem [resolvable:$true] %s308
          %314 = dma.hbm_to_vmem [thread:$0]  %s5, 256, %s309, [#allocation15], 64, 64, 4
        $region24: #{tpu_custom_call.1} parent=11 // pred_fallthru
          _
        // Predicated region
        $region25: #{tpu_custom_call.1} parent=11 // pred_check
          %p315 = pneg %p205
        $region26: #{tpu_custom_call.1} parent=11 // pred_check_branch
          %317 = sbr.rel (%p315) target = $region28
        $region27: #{tpu_custom_call.1} parent=11 // pred_region
          %s319 = ssub.s32 256, 256
          %320 = vsyncadd [#allocation15], %s319
          %s321 = sshll.u32 [#allocation16], 4
          %s322 = int_to_ptr.vmem [resolvable:$true] %s321
          %327 = dma.hbm_to_vmem [thread:$0]  %s6, 256, %s322, [#allocation15], 64, 64, 4
        $region28: #{tpu_custom_call.1} parent=11 // pred_fallthru
          _
      $region12: #{tpu_custom_call.1} parent=5 // pred_fallthru
        _
      %p328 = scmp.lt.s32.totalorder %s29, 2
      // Predicated region
      $region29: #{tpu_custom_call.1} parent=5 // pred_check
        %p329 = pneg %p328
      $region30: #{tpu_custom_call.1} parent=5 // pred_check_branch
        %331 = sbr.rel (%p329) target = $region32
      $region31: #{tpu_custom_call.1} parent=5 // pred_region
        // Predicated region
        $region33: #{tpu_custom_call.1} parent=31 // pred_check
          %p332 = pneg %p63
        $region34: #{tpu_custom_call.1} parent=31 // pred_check_branch
          %334 = sbr.rel (%p332) target = $region36
        $region35: #{tpu_custom_call.1} parent=31 // pred_region
          %s335 = sand.u32 %s53, 1
          %s336 = scalar_lea.sflag [#allocation6], %s335
          %s337 = sand.u32 %s53, 1
          %s338 = smul.addr %s337, 4
          %s339 = scalar_lea.vmem [#allocation5], %s338
          %s341 = ssub.s32 64, 64
          %342 = vsyncadd %s336, %s341
          %s343 = sadd.s32 %s37, %s36
          %s344 = smul.addr %s343, 64
          %s345 = scalar_lea.hbm %s0, %s344
          %s347 = sshll.u32 %s339, 4
          %s348 = int_to_ptr.vmem [resolvable:$true] %s347
          %350 = dma.hbm_to_vmem [thread:$0]  %s345, 64, %s348, %s336
        $region36: #{tpu_custom_call.1} parent=31 // pred_fallthru
          _
        // Predicated region
        $region37: #{tpu_custom_call.1} parent=31 // pred_check
          %p351 = pneg %p89
        $region38: #{tpu_custom_call.1} parent=31 // pred_check_branch
          %353 = sbr.rel (%p351) target = $region40
        $region39: #{tpu_custom_call.1} parent=31 // pred_region
          %s354 = sand.u32 %s29, 1
          %s355 = scalar_lea.sflag [#allocation9], %s354
          %s356 = sand.u32 %s79, 1
          %s357 = smul.addr %s356, 4
          %s358 = scalar_lea.vmem [#allocation8], %s357
          %s360 = ssub.s32 64, 64
          %361 = vsyncadd %s355, %s360
          %s362 = smul.addr %s36, 64
          %s363 = scalar_lea.hbm %s1, %s362
          %s365 = sshll.u32 %s358, 4
          %s366 = int_to_ptr.vmem [resolvable:$true] %s365
          %368 = dma.hbm_to_vmem [thread:$0]  %s363, 64, %s366, %s355
        $region40: #{tpu_custom_call.1} parent=31 // pred_fallthru
          _
        // Predicated region
        $region41: #{tpu_custom_call.1} parent=31 // pred_check
          %p369 = pneg %p115
        $region42: #{tpu_custom_call.1} parent=31 // pred_check_branch
          %371 = sbr.rel (%p369) target = $region44
        $region43: #{tpu_custom_call.1} parent=31 // pred_region
          %s372 = sand.u32 %s29, 1
          %s373 = scalar_lea.sflag [#allocation9], %s372
          %s374 = sand.u32 %s105, 1
          %s375 = smul.addr %s374, 4
          %s376 = scalar_lea.vmem [#allocation10], %s375
          %s378 = ssub.s32 64, 64
          %379 = vsyncadd %s373, %s378
          %s380 = smul.addr %s36, 64
          %s381 = scalar_lea.hbm %s2, %s380
          %s383 = sshll.u32 %s376, 4
          %s384 = int_to_ptr.vmem [resolvable:$true] %s383
          %386 = dma.hbm_to_vmem [thread:$0]  %s381, 64, %s384, %s373
        $region44: #{tpu_custom_call.1} parent=31 // pred_fallthru
          _
      $region32: #{tpu_custom_call.1} parent=5 // pred_fallthru
        _
      %p387 = scmp.le.s32.totalorder 1, %s29
      %p388 = scmp.lt.s32.totalorder %s29, 3
      %p389 = pnand %p387, %p388
      %p390 = pneg %p389
      // Predicated region
      $region45: #{tpu_custom_call.1} parent=5 // pred_check
        _
      $region46: #{tpu_custom_call.1} parent=5 // pred_check_branch
        %392 = sbr.rel (%p389) target = $region48
      $region47: #{tpu_custom_call.1} parent=5 // pred_region
        %s393 = ssub.s32 %s29, 1
        %s394 = sand.u32 %s56, 1
        %s395 = scalar_lea.sflag [#allocation6], %s394
        %s396 = sand.u32 %s56, 1
        %s397 = smul.addr %s396, 4
        %s398 = scalar_lea.vmem [#allocation5], %s397
        // Predicated region
        $region49: #{tpu_custom_call.1} parent=47 // pred_check
          %p399 = pneg %p69
        $region50: #{tpu_custom_call.1} parent=47 // pred_check_branch
          %401 = sbr.rel (%p399) target = $region52
        $region51: #{tpu_custom_call.1} parent=47 // pred_region
          %402 = dma.done %s395, 64
        $region52: #{tpu_custom_call.1} parent=47 // pred_fallthru
          _
        %s403 = sand.u32 %s34, 1
        %s404 = scalar_lea.sflag [#allocation9], %s403
        %s405 = sand.u32 %s82, 1
        %s406 = smul.addr %s405, 4
        %s407 = scalar_lea.vmem [#allocation8], %s406
        // Predicated region
        $region53: #{tpu_custom_call.1} parent=47 // pred_check
          %p408 = pneg %p95
        $region54: #{tpu_custom_call.1} parent=47 // pred_check_branch
          %410 = sbr.rel (%p408) target = $region56
        $region55: #{tpu_custom_call.1} parent=47 // pred_region
          %411 = dma.done %s404, 64
        $region56: #{tpu_custom_call.1} parent=47 // pred_fallthru
          _
        %s412 = sand.u32 %s34, 1
        %s413 = scalar_lea.sflag [#allocation9], %s412
        %s414 = sand.u32 %s108, 1
        %s415 = smul.addr %s414, 4
        %s416 = scalar_lea.vmem [#allocation10], %s415
        // Predicated region
        $region57: #{tpu_custom_call.1} parent=47 // pred_check
          %p417 = pneg %p121
        $region58: #{tpu_custom_call.1} parent=47 // pred_check_branch
          %419 = sbr.rel (%p417) target = $region60
        $region59: #{tpu_custom_call.1} parent=47 // pred_region
          %420 = dma.done %s413, 64
        $region60: #{tpu_custom_call.1} parent=47 // pred_fallthru
          _
        // Predicated region
        $region61: #{tpu_custom_call.1} parent=47 // pred_check
          %p421 = pneg %p142
        $region62: #{tpu_custom_call.1} parent=47 // pred_check_branch
          %423 = sbr.rel (%p421) target = $region64
        $region63: #{tpu_custom_call.1} parent=47 // pred_region
          %424 = dma.done [#allocation12], 256
        $region64: #{tpu_custom_call.1} parent=47 // pred_fallthru
          _
        // Predicated region
        $region65: #{tpu_custom_call.1} parent=47 // pred_check
          %p425 = pneg %p163
        $region66: #{tpu_custom_call.1} parent=47 // pred_check_branch
          %427 = sbr.rel (%p425) target = $region68
        $region67: #{tpu_custom_call.1} parent=47 // pred_region
          %428 = dma.done [#allocation12], 256
        $region68: #{tpu_custom_call.1} parent=47 // pred_fallthru
          _
        // Predicated region
        $region69: #{tpu_custom_call.1} parent=47 // pred_check
          %p429 = pneg %p184
        $region70: #{tpu_custom_call.1} parent=47 // pred_check_branch
          %431 = sbr.rel (%p429) target = $region72
        $region71: #{tpu_custom_call.1} parent=47 // pred_region
          %432 = dma.done [#allocation15], 256
        $region72: #{tpu_custom_call.1} parent=47 // pred_fallthru
          _
        // Predicated region
        $region73: #{tpu_custom_call.1} parent=47 // pred_check
          %p433 = pneg %p205
        $region74: #{tpu_custom_call.1} parent=47 // pred_check_branch
          %435 = sbr.rel (%p433) target = $region76
        $region75: #{tpu_custom_call.1} parent=47 // pred_region
          %436 = dma.done [#allocation15], 256
        $region76: #{tpu_custom_call.1} parent=47 // pred_fallthru
          _
        %s437 = sand.u32 %s56, 1
        %s438 = scalar_lea.sflag [#allocation6], %s437
        %s439 = sand.u32 %s56, 1
        %s440 = smul.addr %s439, 4
        %s441 = scalar_lea.vmem [#allocation5], %s440
        %p442 = pneg %p69
        %p443 = pneg %p66
        %s444 = sand.u32 %s34, 1
        %s445 = scalar_lea.sflag [#allocation9], %s444
        %s446 = sand.u32 %s82, 1
        %s447 = smul.addr %s446, 4
        %s448 = scalar_lea.vmem [#allocation8], %s447
        %p449 = pneg %p95
        %p450 = pneg %p92
        %s451 = sand.u32 %s34, 1
        %s452 = scalar_lea.sflag [#allocation9], %s451
        %s453 = sand.u32 %s108, 1
        %s454 = smul.addr %s453, 4
        %s455 = scalar_lea.vmem [#allocation10], %s454
        %p456 = pneg %p121
        %p457 = pneg %p118
        %p458 = pneg %p142
        %p459 = pneg %p139
        %p460 = pneg %p163
        %p461 = pneg %p160
        %p462 = pneg %p184
        %p463 = pneg %p181
        %p464 = pneg %p205
        %p465 = pneg %p202
        %p466 = pneg %p233
        %p467 = pneg %p230
        %s468 = sand.u32 %s220, 1
        %s469 = scalar_lea.sflag [#allocation7], %s468
        %s470 = sand.u32 %s220, 1
        %s471 = smul.addr %s470, 8
        %s472 = scalar_lea.vmem [#allocation17], %s471
        %p473 = pneg %p261
        %p474 = pneg %p258
        %s475 = sand.u32 %s248, 1
        %s476 = scalar_lea.sflag [#allocation19], %s475
        %s477 = sand.u32 %s248, 1
        %s478 = smul.addr %s477, 16
        %s479 = scalar_lea.vmem [#allocation18], %s478
        %p481 = scmp.eq.s32.totalorder %s39, 0
        // Predicated region
        $region77: #{tpu_custom_call.1} parent=47 // pred_check
          %p482 = pneg %p481
        $region78: #{tpu_custom_call.1} parent=47 // pred_check_branch
          %484 = sbr.rel (%p482) target = $region80
        $region79: #{tpu_custom_call.1} parent=47 // pred_region
          %v485 = vld [vmem:[%s407] sm:$0xf]
          %v486 = vld [vmem:[#allocation13] sm:$0xf]
          %v487 = vld [vmem:[#allocation13 + $0x4] sm:$0xf]
          %v488 = vld [vmem:[#allocation13 + $0x8] sm:$0xf]
          %v489 = vld [vmem:[#allocation13 + $0xc] sm:$0xf]
          %v494 = vunpack.c.l.b16 %v486
          %v495 = vunpack.c.l.b16 %v487
          %v496 = vunpack.c.l.b16 %v488
          %v497 = vunpack.c.l.b16 %v489
          %v498 = vpack.c.b16 %v495, %v494
          %v499 = vpack.c.b16 %v497, %v496
          %vm502 = vcmask 261120
          %v504 = vsel %vm502, %v485, 0
          %506 = vmatprep.subr.bf16.mxu0 0
          %507 = vmatpush1.bf16.msra.mxu0 0
          %508 = vmatprep.subr.bf16.mxu0 0
          %509 = vmatpush1.bf16.msra.mxu0 0
          %510 = vmatprep.subr.bf16.mxu0 0
          %511 = vmatpush1.bf16.msra.mxu0 0
          %512 = vmatprep.subr.bf16.mxu0 0
          %513 = vmatpush1.bf16.msra.mxu0 0
          %514 = vmatprep.subr.bf16.mxu0 0
          %515 = vmatpush1.bf16.msra.mxu0 0
          %516 = vmatprep.subr.bf16.mxu0 0
          %517 = vmatpush1.bf16.msra.mxu0 0
          %518 = vmatprep.subr.bf16.mxu0 0
          %519 = vmatpush1.bf16.msra.mxu0 %v499
          %520 = vmatprep.subr.bf16.mxu0 0
          %521 = vmatpush1.bf16.msra.mxu0 %v498
          %522 = vmatprep.subr.bf16.mxu0 0
          %523 = vmatpush2.bf16.msra.mxu0 0
          %524 = vmatprep.subr.bf16.mxu0 0
          %525 = vmatpush2.bf16.msra.mxu0 0
          %526 = vmatprep.subr.bf16.mxu0 0
          %527 = vmatpush2.bf16.msra.mxu0 0
          %528 = vmatprep.subr.bf16.mxu0 0
          %529 = vmatpush2.bf16.msra.mxu0 0
          %530 = vmatprep.subr.bf16.mxu0 0
          %531 = vmatpush2.bf16.msra.mxu0 0
          %532 = vmatprep.subr.bf16.mxu0 0
          %533 = vmatpush2.bf16.msra.mxu0 0
          %534 = vmatprep.subr.bf16.mxu0 0
          %535 = vmatpush2.bf16.msra.mxu0 0
          %536 = vmatprep.subr.bf16.mxu0 0
          %537 = vmatpush2.bf16.msra.mxu0 0
          %538 = vmatprep.mubr.bf16.mxu0 0
          %539 = vmatmul.mubr.bf16.gmra.mxu0 %v504
          %v540 = vpop.f32.mrf.mxu0
          %v541 = vadd.f32 0.0, %v540
          %v542 = vpop.f32.mrf.mxu0
          %v543 = vpop.f32.mrf.mxu0
          %v544 = vpop.f32.mrf.mxu0
          %545 = vdwg.mxu0
          %v546 = vpack.c.bf16 %v541, %v541
          %vm547 = vcmask 257024
          %548 = vst.msk [vmem:[#allocation2] sm:$0xf] %vm547, %v546
          %v549 = vld [vmem:[%s416] sm:$0xf]
          %v550 = vld [vmem:[#allocation14] sm:$0xf]
          %v551 = vld [vmem:[#allocation14 + $0x4] sm:$0xf]
          %v552 = vld [vmem:[#allocation14 + $0x8] sm:$0xf]
          %v553 = vld [vmem:[#allocation14 + $0xc] sm:$0xf]
          %v558 = vunpack.c.l.b16 %v550
          %v559 = vunpack.c.l.b16 %v551
          %v560 = vunpack.c.l.b16 %v552
          %v561 = vunpack.c.l.b16 %v553
          %v562 = vpack.c.b16 %v559, %v558
          %v563 = vpack.c.b16 %v561, %v560
          %v567 = vsel %vm502, %v549, 0
          %569 = vmatprep.subr.bf16.mxu0 0
          %570 = vmatpush1.bf16.msra.mxu0 0
          %571 = vmatprep.subr.bf16.mxu0 0
          %572 = vmatpush1.bf16.msra.mxu0 0
          %573 = vmatprep.subr.bf16.mxu0 0
          %574 = vmatpush1.bf16.msra.mxu0 0
          %575 = vmatprep.subr.bf16.mxu0 0
          %576 = vmatpush1.bf16.msra.mxu0 0
          %577 = vmatprep.subr.bf16.mxu0 0
          %578 = vmatpush1.bf16.msra.mxu0 0
          %579 = vmatprep.subr.bf16.mxu0 0
          %580 = vmatpush1.bf16.msra.mxu0 0
          %581 = vmatprep.subr.bf16.mxu0 0
          %582 = vmatpush1.bf16.msra.mxu0 %v563
          %583 = vmatprep.subr.bf16.mxu0 0
          %584 = vmatpush1.bf16.msra.mxu0 %v562
          %585 = vmatprep.subr.bf16.mxu0 0
          %586 = vmatpush2.bf16.msra.mxu0 0
          %587 = vmatprep.subr.bf16.mxu0 0
          %588 = vmatpush2.bf16.msra.mxu0 0
          %589 = vmatprep.subr.bf16.mxu0 0
          %590 = vmatpush2.bf16.msra.mxu0 0
          %591 = vmatprep.subr.bf16.mxu0 0
          %592 = vmatpush2.bf16.msra.mxu0 0
          %593 = vmatprep.subr.bf16.mxu0 0
          %594 = vmatpush2.bf16.msra.mxu0 0
          %595 = vmatprep.subr.bf16.mxu0 0
          %596 = vmatpush2.bf16.msra.mxu0 0
          %597 = vmatprep.subr.bf16.mxu0 0
          %598 = vmatpush2.bf16.msra.mxu0 0
          %599 = vmatprep.subr.bf16.mxu0 0
          %600 = vmatpush2.bf16.msra.mxu0 0
          %601 = vmatprep.mubr.bf16.mxu0 0
          %602 = vmatmul.mubr.bf16.gmra.mxu0 %v567
          %v603 = vpop.f32.mrf.mxu0
          %v604 = vadd.f32 0.0, %v603
          %v605 = vpop.f32.mrf.mxu0
          %v606 = vpop.f32.mrf.mxu0
          %v607 = vpop.f32.mrf.mxu0
          %608 = vdwg.mxu0
          %v609 = vpack.c.bf16 %v604, %v604
          %610 = vst.msk [vmem:[#allocation3] sm:$0xf] %vm547, %v609
        $region80: #{tpu_custom_call.1} parent=47 // pred_fallthru
          _
        %v611 = vld [vmem:[%s398] sm:$0xf]
        %v612 = vld [vmem:[#allocation11] sm:$0xf]
        %v613 = vld [vmem:[#allocation11 + $0x4] sm:$0xf]
        %v614 = vld [vmem:[#allocation11 + $0x8] sm:$0xf]
        %v615 = vld [vmem:[#allocation11 + $0xc] sm:$0xf]
        %v620 = vunpack.c.l.b16 %v612
        %v621 = vunpack.c.l.b16 %v613
        %v622 = vunpack.c.l.b16 %v614
        %v623 = vunpack.c.l.b16 %v615
        %v624 = vpack.c.b16 %v621, %v620
        %v625 = vpack.c.b16 %v623, %v622
        %vm628 = vcmask 261120
        %v630 = vsel %vm628, %v611, 0
        %632 = vmatprep.subr.bf16.mxu0 0
        %633 = vmatpush1.bf16.msra.mxu0 0
        %634 = vmatprep.subr.bf16.mxu0 0
        %635 = vmatpush1.bf16.msra.mxu0 0
        %636 = vmatprep.subr.bf16.mxu0 0
        %637 = vmatpush1.bf16.msra.mxu0 0
        %638 = vmatprep.subr.bf16.mxu0 0
        %639 = vmatpush1.bf16.msra.mxu0 0
        %640 = vmatprep.subr.bf16.mxu0 0
        %641 = vmatpush1.bf16.msra.mxu0 0
        %642 = vmatprep.subr.bf16.mxu0 0
        %643 = vmatpush1.bf16.msra.mxu0 0
        %644 = vmatprep.subr.bf16.mxu0 0
        %645 = vmatpush1.bf16.msra.mxu0 %v625
        %646 = vmatprep.subr.bf16.mxu0 0
        %647 = vmatpush1.bf16.msra.mxu0 %v624
        %648 = vmatprep.subr.bf16.mxu0 0
        %649 = vmatpush2.bf16.msra.mxu0 0
        %650 = vmatprep.subr.bf16.mxu0 0
        %651 = vmatpush2.bf16.msra.mxu0 0
        %652 = vmatprep.subr.bf16.mxu0 0
        %653 = vmatpush2.bf16.msra.mxu0 0
        %654 = vmatprep.subr.bf16.mxu0 0
        %655 = vmatpush2.bf16.msra.mxu0 0
        %656 = vmatprep.subr.bf16.mxu0 0
        %657 = vmatpush2.bf16.msra.mxu0 0
        %658 = vmatprep.subr.bf16.mxu0 0
        %659 = vmatpush2.bf16.msra.mxu0 0
        %660 = vmatprep.subr.bf16.mxu0 0
        %661 = vmatpush2.bf16.msra.mxu0 0
        %662 = vmatprep.subr.bf16.mxu0 0
        %663 = vmatpush2.bf16.msra.mxu0 0
        %664 = vmatprep.mubr.bf16.mxu0 0
        %665 = vmatmul.mubr.bf16.gmra.mxu0 %v630
        %v666 = vpop.f32.mrf.mxu0
        %v667 = vadd.f32 0.0, %v666
        %v668 = vpop.f32.mrf.mxu0
        %v669 = vpop.f32.mrf.mxu0
        %v670 = vpop.f32.mrf.mxu0
        %671 = vdwg.mxu0
        %v672 = vpack.c.bf16 %v667, %v667
        %v673 = vld [vmem:[#allocation2] sm:$0xf]
        %v674 = vld [vmem:[#allocation3] sm:$0xf]
        %vm675 = vcmask 64512
        %v677 = vsel %vm675, %v672, 0
        %v680 = vsel %vm675, %v673, 0
        %682 = vmatprep.subr.bf16.mxu0 0
        %683 = vmatpush1.bf16.xpose.msra.mxu0 0
        %684 = vmatprep.subr.bf16.mxu0 0
        %685 = vmatpush1.bf16.xpose.msra.mxu0 0
        %686 = vmatprep.subr.bf16.mxu0 0
        %687 = vmatpush1.bf16.xpose.msra.mxu0 0
        %688 = vmatprep.subr.bf16.mxu0 0
        %689 = vmatpush1.bf16.xpose.msra.mxu0 0
        %690 = vmatprep.subr.bf16.mxu0 0
        %691 = vmatpush1.bf16.xpose.msra.mxu0 0
        %692 = vmatprep.subr.bf16.mxu0 0
        %693 = vmatpush1.bf16.xpose.msra.mxu0 0
        %694 = vmatprep.subr.bf16.mxu0 0
        %695 = vmatpush1.bf16.xpose.msra.mxu0 0
        %696 = vmatprep.subr.bf16.mxu0 0
        %697 = vmatpush1.bf16.xpose.msra.mxu0 %v680
        %698 = vmatprep.subr.bf16.mxu0 0
        %699 = vmatpush2.bf16.xpose.msra.mxu0 0
        %700 = vmatprep.subr.bf16.mxu0 0
        %701 = vmatpush2.bf16.xpose.msra.mxu0 0
        %702 = vmatprep.subr.bf16.mxu0 0
        %703 = vmatpush2.bf16.xpose.msra.mxu0 0
        %704 = vmatprep.subr.bf16.mxu0 0
        %705 = vmatpush2.bf16.xpose.msra.mxu0 0
        %706 = vmatprep.subr.bf16.mxu0 0
        %707 = vmatpush2.bf16.xpose.msra.mxu0 0
        %708 = vmatprep.subr.bf16.mxu0 0
        %709 = vmatpush2.bf16.xpose.msra.mxu0 0
        %710 = vmatprep.subr.bf16.mxu0 0
        %711 = vmatpush2.bf16.xpose.msra.mxu0 0
        %712 = vmatprep.subr.bf16.mxu0 0
        %713 = vmatpush2.bf16.xpose.msra.mxu0 0
        %714 = vmatprep.mubr.bf16.mxu0 0
        %715 = vmatmul.mubr.bf16.gmra.mxu0 %v677
        %v716 = vpop.f32.mrf.mxu0
        %v717 = vadd.f32 0.0, %v716
        %v718 = vpop.f32.mrf.mxu0
        %v719 = vpop.f32.mrf.mxu0
        %v720 = vpop.f32.mrf.mxu0
        %721 = vdwg.mxu0
        %v722 = vsel %vm675, %v717, -inf
        %723 = vmax.xlane.f32.xlu0 %v722
        %v724 = vpop.xlane.xlu0 %723
        %v725 = vsub.f32 %v717, %v724
        %v726 = vmul.f32 %v725, 1.442695
        %v727 = vpow.pop %v726
        %v728 = vsel %vm675, %v727, 0.0
        %729 = vadd.xlane.f32.xlu0 %v728
        %v730 = vpop.xlane.xlu0 %729
        %v731 = vrcp.pop %v730
        %v732 = vmul.f32 %v727, %v731
        %v733 = vpack.c.bf16 %v732, %v732
        %vm734 = vcmask 60416
        %735 = vst.msk [vmem:[%s479] sm:$0xf] %vm734, %v733
        %v737 = vsel %vm675, %v733, 0
        %vm739 = vcmask 1043456
        %v741 = vsel %vm739, %v674, 0
        %743 = vmatprep.subr.bf16.mxu0 0
        %744 = vmatpush1.bf16.msra.mxu0 0
        %745 = vmatprep.subr.bf16.mxu0 0
        %746 = vmatpush1.bf16.msra.mxu0 0
        %747 = vmatprep.subr.bf16.mxu0 0
        %748 = vmatpush1.bf16.msra.mxu0 0
        %749 = vmatprep.subr.bf16.mxu0 0
        %750 = vmatpush1.bf16.msra.mxu0 0
        %751 = vmatprep.subr.bf16.mxu0 0
        %752 = vmatpush1.bf16.msra.mxu0 0
        %753 = vmatprep.subr.bf16.mxu0 0
        %754 = vmatpush1.bf16.msra.mxu0 0
        %755 = vmatprep.subr.bf16.mxu0 0
        %756 = vmatpush1.bf16.msra.mxu0 0
        %757 = vmatprep.subr.bf16.mxu0 0
        %758 = vmatpush1.bf16.msra.mxu0 %v741
        %759 = vmatprep.subr.bf16.mxu0 0
        %760 = vmatpush2.bf16.msra.mxu0 0
        %761 = vmatprep.subr.bf16.mxu0 0
        %762 = vmatpush2.bf16.msra.mxu0 0
        %763 = vmatprep.subr.bf16.mxu0 0
        %764 = vmatpush2.bf16.msra.mxu0 0
        %765 = vmatprep.subr.bf16.mxu0 0
        %766 = vmatpush2.bf16.msra.mxu0 0
        %767 = vmatprep.subr.bf16.mxu0 0
        %768 = vmatpush2.bf16.msra.mxu0 0
        %769 = vmatprep.subr.bf16.mxu0 0
        %770 = vmatpush2.bf16.msra.mxu0 0
        %771 = vmatprep.subr.bf16.mxu0 0
        %772 = vmatpush2.bf16.msra.mxu0 0
        %773 = vmatprep.subr.bf16.mxu0 0
        %774 = vmatpush2.bf16.msra.mxu0 0
        %775 = vmatprep.mubr.bf16.mxu0 0
        %776 = vmatmul.mubr.bf16.gmra.mxu0 %v737
        %v777 = vpop.f32.mrf.mxu0
        %v778 = vadd.f32 0.0, %v777
        %v779 = vpop.f32.mrf.mxu0
        %v780 = vpop.f32.mrf.mxu0
        %v781 = vpop.f32.mrf.mxu0
        %782 = vdwg.mxu0
        %v783 = vpack.c.bf16 %v778, %v778
        %784 = vst.msk [vmem:[#allocation4] sm:$0xf] %vm734, %v783
        %v785 = vld [vmem:[#allocation2] sm:$0xf]
        %v786 = vld [vmem:[#allocation3] sm:$0xf]
        %788 = vrot.lane.b32.xlu0 %v672, 120
        %v789 = vpop.permute.xlu0 %788
        %v791 = vunpack.c.l.b16 %v785
        %v792 = vpack.c.b16 %v791, %v791
        %793 = vrot.lane.b32.xlu0 %v792, 120
        %v794 = vpop.permute.xlu0 %793
        %v796 = vsel %vm675, %v789, 0
        %v799 = vsel %vm675, %v794, 0
        %801 = vmatprep.subr.bf16.mxu0 0
        %802 = vmatpush1.bf16.xpose.msra.mxu0 0
        %803 = vmatprep.subr.bf16.mxu0 0
        %804 = vmatpush1.bf16.xpose.msra.mxu0 0
        %805 = vmatprep.subr.bf16.mxu0 0
        %806 = vmatpush1.bf16.xpose.msra.mxu0 0
        %807 = vmatprep.subr.bf16.mxu0 0
        %808 = vmatpush1.bf16.xpose.msra.mxu0 0
        %809 = vmatprep.subr.bf16.mxu0 0
        %810 = vmatpush1.bf16.xpose.msra.mxu0 0
        %811 = vmatprep.subr.bf16.mxu0 0
        %812 = vmatpush1.bf16.xpose.msra.mxu0 0
        %813 = vmatprep.subr.bf16.mxu0 0
        %814 = vmatpush1.bf16.xpose.msra.mxu0 0
        %815 = vmatprep.subr.bf16.mxu0 0
        %816 = vmatpush1.bf16.xpose.msra.mxu0 %v799
        %817 = vmatprep.subr.bf16.mxu0 0
        %818 = vmatpush2.bf16.xpose.msra.mxu0 0
        %819 = vmatprep.subr.bf16.mxu0 0
        %820 = vmatpush2.bf16.xpose.msra.mxu0 0
        %821 = vmatprep.subr.bf16.mxu0 0
        %822 = vmatpush2.bf16.xpose.msra.mxu0 0
        %823 = vmatprep.subr.bf16.mxu0 0
        %824 = vmatpush2.bf16.xpose.msra.mxu0 0
        %825 = vmatprep.subr.bf16.mxu0 0
        %826 = vmatpush2.bf16.xpose.msra.mxu0 0
        %827 = vmatprep.subr.bf16.mxu0 0
        %828 = vmatpush2.bf16.xpose.msra.mxu0 0
        %829 = vmatprep.subr.bf16.mxu0 0
        %830 = vmatpush2.bf16.xpose.msra.mxu0 0
        %831 = vmatprep.subr.bf16.mxu0 0
        %832 = vmatpush2.bf16.xpose.msra.mxu0 0
        %833 = vmatprep.mubr.bf16.mxu0 0
        %834 = vmatmul.mubr.bf16.gmra.mxu0 %v796
        %v835 = vpop.f32.mrf.mxu0
        %v836 = vadd.f32 0.0, %v835
        %v837 = vpop.f32.mrf.mxu0
        %v838 = vpop.f32.mrf.mxu0
        %v839 = vpop.f32.mrf.mxu0
        %840 = vdwg.mxu0
        %v841 = vsel %vm675, %v836, -inf
        %842 = vmax.xlane.f32.xlu0 %v841
        %v843 = vpop.xlane.xlu0 %842
        %v844 = vsub.f32 %v836, %v843
        %v845 = vmul.f32 %v844, 1.442695
        %v846 = vpow.pop %v845
        %v847 = vsel %vm675, %v846, 0.0
        %848 = vadd.xlane.f32.xlu0 %v847
        %v849 = vpop.xlane.xlu0 %848
        %v850 = vrcp.pop %v849
        %v851 = vmul.f32 %v846, %v850
        %v852 = vpack.c.bf16 %v851, %v851
        %s853 = scalar_lea.vmem %s479, 4 [#allocation18]
        %854 = vst.msk [vmem:[%s853] sm:$0xf] %vm734, %v852
        %v856 = vunpack.c.l.b16 %v786
        %v857 = vpack.c.b16 %v856, %v856
        %858 = vrot.lane.b32.xlu0 %v857, 120
        %v859 = vpop.permute.xlu0 %858
        %v861 = vsel %vm675, %v852, 0
        %v864 = vsel %vm739, %v859, 0
        %866 = vmatprep.subr.bf16.mxu0 0
        %867 = vmatpush1.bf16.msra.mxu0 0
        %868 = vmatprep.subr.bf16.mxu0 0
        %869 = vmatpush1.bf16.msra.mxu0 0
        %870 = vmatprep.subr.bf16.mxu0 0
        %871 = vmatpush1.bf16.msra.mxu0 0
        %872 = vmatprep.subr.bf16.mxu0 0
        %873 = vmatpush1.bf16.msra.mxu0 0
        %874 = vmatprep.subr.bf16.mxu0 0
        %875 = vmatpush1.bf16.msra.mxu0 0
        %876 = vmatprep.subr.bf16.mxu0 0
        %877 = vmatpush1.bf16.msra.mxu0 0
        %878 = vmatprep.subr.bf16.mxu0 0
        %879 = vmatpush1.bf16.msra.mxu0 0
        %880 = vmatprep.subr.bf16.mxu0 0
        %881 = vmatpush1.bf16.msra.mxu0 %v864
        %882 = vmatprep.subr.bf16.mxu0 0
        %883 = vmatpush2.bf16.msra.mxu0 0
        %884 = vmatprep.subr.bf16.mxu0 0
        %885 = vmatpush2.bf16.msra.mxu0 0
        %886 = vmatprep.subr.bf16.mxu0 0
        %887 = vmatpush2.bf16.msra.mxu0 0
        %888 = vmatprep.subr.bf16.mxu0 0
        %889 = vmatpush2.bf16.msra.mxu0 0
        %890 = vmatprep.subr.bf16.mxu0 0
        %891 = vmatpush2.bf16.msra.mxu0 0
        %892 = vmatprep.subr.bf16.mxu0 0
        %893 = vmatpush2.bf16.msra.mxu0 0
        %894 = vmatprep.subr.bf16.mxu0 0
        %895 = vmatpush2.bf16.msra.mxu0 0
        %896 = vmatprep.subr.bf16.mxu0 0
        %897 = vmatpush2.bf16.msra.mxu0 0
        %898 = vmatprep.mubr.bf16.mxu0 0
        %899 = vmatmul.mubr.bf16.gmra.mxu0 %v861
        %v900 = vpop.f32.mrf.mxu0
        %v901 = vadd.f32 0.0, %v900
        %v902 = vpop.f32.mrf.mxu0
        %v903 = vpop.f32.mrf.mxu0
        %v904 = vpop.f32.mrf.mxu0
        %905 = vdwg.mxu0
        %v906 = vpack.c.bf16 %v901, %v901
        %v908 = vunpack.c.l.b16 %v906
        %v909 = vpack.c.b16 %v908, %v908
        %910 = vrot.lane.b32.xlu0 %v909, 8
        %v911 = vpop.permute.xlu0 %910
        %vm913 = vcmask 126016
        %914 = vst.msk [vmem:[#allocation4] sm:$0xf] %vm913, %v911
        %v915 = vld [vmem:[#allocation2] sm:$0xf]
        %v916 = vld [vmem:[#allocation3] sm:$0xf]
        %917 = vrot.lane.b32.xlu0 %v672, 112
        %v918 = vpop.permute.xlu0 %917
        %v920 = vunpack.c.l.b16 %v915
        %v921 = vpack.c.b16 %v920, %v920
        %922 = vrot.lane.b32.xlu0 %v921, 112
        %v923 = vpop.permute.xlu0 %922
        %v925 = vsel %vm675, %v918, 0
        %v928 = vsel %vm675, %v923, 0
        %930 = vmatprep.subr.bf16.mxu0 0
        %931 = vmatpush1.bf16.xpose.msra.mxu0 0
        %932 = vmatprep.subr.bf16.mxu0 0
        %933 = vmatpush1.bf16.xpose.msra.mxu0 0
        %934 = vmatprep.subr.bf16.mxu0 0
        %935 = vmatpush1.bf16.xpose.msra.mxu0 0
        %936 = vmatprep.subr.bf16.mxu0 0
        %937 = vmatpush1.bf16.xpose.msra.mxu0 0
        %938 = vmatprep.subr.bf16.mxu0 0
        %939 = vmatpush1.bf16.xpose.msra.mxu0 0
        %940 = vmatprep.subr.bf16.mxu0 0
        %941 = vmatpush1.bf16.xpose.msra.mxu0 0
        %942 = vmatprep.subr.bf16.mxu0 0
        %943 = vmatpush1.bf16.xpose.msra.mxu0 0
        %944 = vmatprep.subr.bf16.mxu0 0
        %945 = vmatpush1.bf16.xpose.msra.mxu0 %v928
        %946 = vmatprep.subr.bf16.mxu0 0
        %947 = vmatpush2.bf16.xpose.msra.mxu0 0
        %948 = vmatprep.subr.bf16.mxu0 0
        %949 = vmatpush2.bf16.xpose.msra.mxu0 0
        %950 = vmatprep.subr.bf16.mxu0 0
        %951 = vmatpush2.bf16.xpose.msra.mxu0 0
        %952 = vmatprep.subr.bf16.mxu0 0
        %953 = vmatpush2.bf16.xpose.msra.mxu0 0
        %954 = vmatprep.subr.bf16.mxu0 0
        %955 = vmatpush2.bf16.xpose.msra.mxu0 0
        %956 = vmatprep.subr.bf16.mxu0 0
        %957 = vmatpush2.bf16.xpose.msra.mxu0 0
        %958 = vmatprep.subr.bf16.mxu0 0
        %959 = vmatpush2.bf16.xpose.msra.mxu0 0
        %960 = vmatprep.subr.bf16.mxu0 0
        %961 = vmatpush2.bf16.xpose.msra.mxu0 0
        %962 = vmatprep.mubr.bf16.mxu0 0
        %963 = vmatmul.mubr.bf16.gmra.mxu0 %v925
        %v964 = vpop.f32.mrf.mxu0
        %v965 = vadd.f32 0.0, %v964
        %v966 = vpop.f32.mrf.mxu0
        %v967 = vpop.f32.mrf.mxu0
        %v968 = vpop.f32.mrf.mxu0
        %969 = vdwg.mxu0
        %v970 = vsel %vm675, %v965, -inf
        %971 = vmax.xlane.f32.xlu0 %v970
        %v972 = vpop.xlane.xlu0 %971
        %v973 = vsub.f32 %v965, %v972
        %v974 = vmul.f32 %v973, 1.442695
        %v975 = vpow.pop %v974
        %v976 = vsel %vm675, %v975, 0.0
        %977 = vadd.xlane.f32.xlu0 %v976
        %v978 = vpop.xlane.xlu0 %977
        %v979 = vrcp.pop %v978
        %v980 = vmul.f32 %v975, %v979
        %v981 = vpack.c.bf16 %v980, %v980
        %s982 = scalar_lea.vmem %s479, 8 [#allocation18]
        %983 = vst.msk [vmem:[%s982] sm:$0xf] %vm734, %v981
        %v985 = vunpack.c.l.b16 %v916
        %v986 = vpack.c.b16 %v985, %v985
        %987 = vrot.lane.b32.xlu0 %v986, 112
        %v988 = vpop.permute.xlu0 %987
        %v990 = vsel %vm675, %v981, 0
        %v993 = vsel %vm739, %v988, 0
        %995 = vmatprep.subr.bf16.mxu0 0
        %996 = vmatpush1.bf16.msra.mxu0 0
        %997 = vmatprep.subr.bf16.mxu0 0
        %998 = vmatpush1.bf16.msra.mxu0 0
        %999 = vmatprep.subr.bf16.mxu0 0
        %1000 = vmatpush1.bf16.msra.mxu0 0
        %1001 = vmatprep.subr.bf16.mxu0 0
        %1002 = vmatpush1.bf16.msra.mxu0 0
        %1003 = vmatprep.subr.bf16.mxu0 0
        %1004 = vmatpush1.bf16.msra.mxu0 0
        %1005 = vmatprep.subr.bf16.mxu0 0
        %1006 = vmatpush1.bf16.msra.mxu0 0
        %1007 = vmatprep.subr.bf16.mxu0 0
        %1008 = vmatpush1.bf16.msra.mxu0 0
        %1009 = vmatprep.subr.bf16.mxu0 0
        %1010 = vmatpush1.bf16.msra.mxu0 %v993
        %1011 = vmatprep.subr.bf16.mxu0 0
        %1012 = vmatpush2.bf16.msra.mxu0 0
        %1013 = vmatprep.subr.bf16.mxu0 0
        %1014 = vmatpush2.bf16.msra.mxu0 0
        %1015 = vmatprep.subr.bf16.mxu0 0
        %1016 = vmatpush2.bf16.msra.mxu0 0
        %1017 = vmatprep.subr.bf16.mxu0 0
        %1018 = vmatpush2.bf16.msra.mxu0 0
        %1019 = vmatprep.subr.bf16.mxu0 0
        %1020 = vmatpush2.bf16.msra.mxu0 0
        %1021 = vmatprep.subr.bf16.mxu0 0
        %1022 = vmatpush2.bf16.msra.mxu0 0
        %1023 = vmatprep.subr.bf16.mxu0 0
        %1024 = vmatpush2.bf16.msra.mxu0 0
        %1025 = vmatprep.subr.bf16.mxu0 0
        %1026 = vmatpush2.bf16.msra.mxu0 0
        %1027 = vmatprep.mubr.bf16.mxu0 0
        %1028 = vmatmul.mubr.bf16.gmra.mxu0 %v990
        %v1029 = vpop.f32.mrf.mxu0
        %v1030 = vadd.f32 0.0, %v1029
        %v1031 = vpop.f32.mrf.mxu0
        %v1032 = vpop.f32.mrf.mxu0
        %v1033 = vpop.f32.mrf.mxu0
        %1034 = vdwg.mxu0
        %v1035 = vpack.c.bf16 %v1030, %v1030
        %v1037 = vunpack.c.l.b16 %v1035
        %v1038 = vpack.c.b16 %v1037, %v1037
        %1039 = vrot.lane.b32.xlu0 %v1038, 16
        %v1040 = vpop.permute.xlu0 %1039
        %vm1042 = vcmask 191616
        %1043 = vst.msk [vmem:[#allocation4] sm:$0xf] %vm1042, %v1040
        %v1044 = vld [vmem:[#allocation2] sm:$0xf]
        %v1045 = vld [vmem:[#allocation3] sm:$0xf]
        %1046 = vrot.lane.b32.xlu0 %v672, 104
        %v1047 = vpop.permute.xlu0 %1046
        %v1049 = vunpack.c.l.b16 %v1044
        %v1050 = vpack.c.b16 %v1049, %v1049
        %1051 = vrot.lane.b32.xlu0 %v1050, 104
        %v1052 = vpop.permute.xlu0 %1051
        %v1054 = vsel %vm675, %v1047, 0
        %v1057 = vsel %vm675, %v1052, 0
        %1059 = vmatprep.subr.bf16.mxu0 0
        %1060 = vmatpush1.bf16.xpose.msra.mxu0 0
        %1061 = vmatprep.subr.bf16.mxu0 0
        %1062 = vmatpush1.bf16.xpose.msra.mxu0 0
        %1063 = vmatprep.subr.bf16.mxu0 0
        %1064 = vmatpush1.bf16.xpose.msra.mxu0 0
        %1065 = vmatprep.subr.bf16.mxu0 0
        %1066 = vmatpush1.bf16.xpose.msra.mxu0 0
        %1067 = vmatprep.subr.bf16.mxu0 0
        %1068 = vmatpush1.bf16.xpose.msra.mxu0 0
        %1069 = vmatprep.subr.bf16.mxu0 0
        %1070 = vmatpush1.bf16.xpose.msra.mxu0 0
        %1071 = vmatprep.subr.bf16.mxu0 0
        %1072 = vmatpush1.bf16.xpose.msra.mxu0 0
        %1073 = vmatprep.subr.bf16.mxu0 0
        %1074 = vmatpush1.bf16.xpose.msra.mxu0 %v1057
        %1075 = vmatprep.subr.bf16.mxu0 0
        %1076 = vmatpush2.bf16.xpose.msra.mxu0 0
        %1077 = vmatprep.subr.bf16.mxu0 0
        %1078 = vmatpush2.bf16.xpose.msra.mxu0 0
        %1079 = vmatprep.subr.bf16.mxu0 0
        %1080 = vmatpush2.bf16.xpose.msra.mxu0 0
        %1081 = vmatprep.subr.bf16.mxu0 0
        %1082 = vmatpush2.bf16.xpose.msra.mxu0 0
        %1083 = vmatprep.subr.bf16.mxu0 0
        %1084 = vmatpush2.bf16.xpose.msra.mxu0 0
        %1085 = vmatprep.subr.bf16.mxu0 0
        %1086 = vmatpush2.bf16.xpose.msra.mxu0 0
        %1087 = vmatprep.subr.bf16.mxu0 0
        %1088 = vmatpush2.bf16.xpose.msra.mxu0 0
        %1089 = vmatprep.subr.bf16.mxu0 0
        %1090 = vmatpush2.bf16.xpose.msra.mxu0 0
        %1091 = vmatprep.mubr.bf16.mxu0 0
        %1092 = vmatmul.mubr.bf16.gmra.mxu0 %v1054
        %v1093 = vpop.f32.mrf.mxu0
        %v1094 = vadd.f32 0.0, %v1093
        %v1095 = vpop.f32.mrf.mxu0
        %v1096 = vpop.f32.mrf.mxu0
        %v1097 = vpop.f32.mrf.mxu0
        %1098 = vdwg.mxu0
        %v1099 = vsel %vm675, %v1094, -inf
        %1100 = vmax.xlane.f32.xlu0 %v1099
        %v1101 = vpop.xlane.xlu0 %1100
        %v1102 = vsub.f32 %v1094, %v1101
        %v1103 = vmul.f32 %v1102, 1.442695
        %v1104 = vpow.pop %v1103
        %v1105 = vsel %vm675, %v1104, 0.0
        %1106 = vadd.xlane.f32.xlu0 %v1105
        %v1107 = vpop.xlane.xlu0 %1106
        %v1108 = vrcp.pop %v1107
        %v1109 = vmul.f32 %v1104, %v1108
        %v1110 = vpack.c.bf16 %v1109, %v1109
        %s1111 = scalar_lea.vmem %s479, 12 [#allocation18]
        %1112 = vst.msk [vmem:[%s1111] sm:$0xf] %vm734, %v1110
        %v1114 = vunpack.c.l.b16 %v1045
        %v1115 = vpack.c.b16 %v1114, %v1114
        %1116 = vrot.lane.b32.xlu0 %v1115, 104
        %v1117 = vpop.permute.xlu0 %1116
        %v1119 = vsel %vm675, %v1110, 0
        %v1122 = vsel %vm739, %v1117, 0
        %1124 = vmatprep.subr.bf16.mxu0 0
        %1125 = vmatpush1.bf16.msra.mxu0 0
        %1126 = vmatprep.subr.bf16.mxu0 0
        %1127 = vmatpush1.bf16.msra.mxu0 0
        %1128 = vmatprep.subr.bf16.mxu0 0
        %1129 = vmatpush1.bf16.msra.mxu0 0
        %1130 = vmatprep.subr.bf16.mxu0 0
        %1131 = vmatpush1.bf16.msra.mxu0 0
        %1132 = vmatprep.subr.bf16.mxu0 0
        %1133 = vmatpush1.bf16.msra.mxu0 0
        %1134 = vmatprep.subr.bf16.mxu0 0
        %1135 = vmatpush1.bf16.msra.mxu0 0
        %1136 = vmatprep.subr.bf16.mxu0 0
        %1137 = vmatpush1.bf16.msra.mxu0 0
        %1138 = vmatprep.subr.bf16.mxu0 0
        %1139 = vmatpush1.bf16.msra.mxu0 %v1122
        %1140 = vmatprep.subr.bf16.mxu0 0
        %1141 = vmatpush2.bf16.msra.mxu0 0
        %1142 = vmatprep.subr.bf16.mxu0 0
        %1143 = vmatpush2.bf16.msra.mxu0 0
        %1144 = vmatprep.subr.bf16.mxu0 0
        %1145 = vmatpush2.bf16.msra.mxu0 0
        %1146 = vmatprep.subr.bf16.mxu0 0
        %1147 = vmatpush2.bf16.msra.mxu0 0
        %1148 = vmatprep.subr.bf16.mxu0 0
        %1149 = vmatpush2.bf16.msra.mxu0 0
        %1150 = vmatprep.subr.bf16.mxu0 0
        %1151 = vmatpush2.bf16.msra.mxu0 0
        %1152 = vmatprep.subr.bf16.mxu0 0
        %1153 = vmatpush2.bf16.msra.mxu0 0
        %1154 = vmatprep.subr.bf16.mxu0 0
        %1155 = vmatpush2.bf16.msra.mxu0 0
        %1156 = vmatprep.mubr.bf16.mxu0 0
        %1157 = vmatmul.mubr.bf16.gmra.mxu0 %v1119
        %v1158 = vpop.f32.mrf.mxu0
        %v1159 = vadd.f32 0.0, %v1158
        %v1160 = vpop.f32.mrf.mxu0
        %v1161 = vpop.f32.mrf.mxu0
        %v1162 = vpop.f32.mrf.mxu0
        %1163 = vdwg.mxu0
        %v1164 = vpack.c.bf16 %v1159, %v1159
        %v1166 = vunpack.c.l.b16 %v1164
        %v1167 = vpack.c.b16 %v1166, %v1166
        %1168 = vrot.lane.b32.xlu0 %v1167, 24
        %v1169 = vpop.permute.xlu0 %1168
        %vm1171 = vcmask 257216
        %1172 = vst.msk [vmem:[#allocation4] sm:$0xf] %vm1171, %v1169
        %v1173 = vld [vmem:[#allocation4] sm:$0xf]
        %v1174 = vld [vmem:[#allocation16] sm:$0xf]
        %v1175 = vld [vmem:[#allocation16 + $0x4] sm:$0xf]
        %v1176 = vld [vmem:[#allocation16 + $0x8] sm:$0xf]
        %v1177 = vld [vmem:[#allocation16 + $0xc] sm:$0xf]
        %v1182 = vunpack.c.l.b16 %v1174
        %v1183 = vunpack.c.l.b16 %v1175
        %v1184 = vunpack.c.l.b16 %v1176
        %v1185 = vunpack.c.l.b16 %v1177
        %v1186 = vpack.c.b16 %v1183, %v1182
        %v1187 = vpack.c.b16 %v1185, %v1184
        %v1191 = vsel %vm628, %v1173, 0
        %1193 = vmatprep.subr.bf16.mxu0 0
        %1194 = vmatpush1.bf16.msra.mxu0 0
        %1195 = vmatprep.subr.bf16.mxu0 0
        %1196 = vmatpush1.bf16.msra.mxu0 0
        %1197 = vmatprep.subr.bf16.mxu0 0
        %1198 = vmatpush1.bf16.msra.mxu0 0
        %1199 = vmatprep.subr.bf16.mxu0 0
        %1200 = vmatpush1.bf16.msra.mxu0 0
        %1201 = vmatprep.subr.bf16.mxu0 0
        %1202 = vmatpush1.bf16.msra.mxu0 0
        %1203 = vmatprep.subr.bf16.mxu0 0
        %1204 = vmatpush1.bf16.msra.mxu0 0
        %1205 = vmatprep.subr.bf16.mxu0 0
        %1206 = vmatpush1.bf16.msra.mxu0 %v1187
        %1207 = vmatprep.subr.bf16.mxu0 0
        %1208 = vmatpush1.bf16.msra.mxu0 %v1186
        %1209 = vmatprep.subr.bf16.mxu0 0
        %1210 = vmatpush2.bf16.msra.mxu0 0
        %1211 = vmatprep.subr.bf16.mxu0 0
        %1212 = vmatpush2.bf16.msra.mxu0 0
        %1213 = vmatprep.subr.bf16.mxu0 0
        %1214 = vmatpush2.bf16.msra.mxu0 0
        %1215 = vmatprep.subr.bf16.mxu0 0
        %1216 = vmatpush2.bf16.msra.mxu0 0
        %1217 = vmatprep.subr.bf16.mxu0 0
        %1218 = vmatpush2.bf16.msra.mxu0 0
        %1219 = vmatprep.subr.bf16.mxu0 0
        %1220 = vmatpush2.bf16.msra.mxu0 0
        %1221 = vmatprep.subr.bf16.mxu0 0
        %1222 = vmatpush2.bf16.msra.mxu0 0
        %1223 = vmatprep.subr.bf16.mxu0 0
        %1224 = vmatpush2.bf16.msra.mxu0 0
        %1225 = vmatprep.mubr.bf16.mxu0 0
        %1226 = vmatmul.mubr.bf16.gmra.mxu0 %v1191
        %v1227 = vpop.f32.mrf.mxu0
        %v1228 = vadd.f32 0.0, %v1227
        %v1229 = vpop.f32.mrf.mxu0
        %v1230 = vpop.f32.mrf.mxu0
        %v1231 = vpop.f32.mrf.mxu0
        %1232 = vdwg.mxu0
        %1233 = vst.msk [vmem:[%s472] sm:$0xff] %vm628, %v1228
        %s1234 = sand.u32 %s220, 1
        %s1235 = scalar_lea.sflag [#allocation7], %s1234
        %s1236 = sand.u32 %s220, 1
        %s1237 = smul.addr %s1236, 8
        %s1238 = scalar_lea.vmem [#allocation17], %s1237
        %s1239 = sand.u32 %s248, 1
        %s1240 = scalar_lea.sflag [#allocation19], %s1239
        %s1241 = sand.u32 %s248, 1
        %s1242 = smul.addr %s1241, 16
        %s1243 = scalar_lea.vmem [#allocation18], %s1242
        // Predicated region
        $region81: #{tpu_custom_call.1} parent=47 // pred_check
          %p1244 = pneg %p230
        $region82: #{tpu_custom_call.1} parent=47 // pred_check_branch
          %1246 = sbr.rel (%p1244) target = $region84
        $region83: #{tpu_custom_call.1} parent=47 // pred_region
          %s1248 = ssub.s32 128, 128
          %1249 = vsyncadd %s1235, %s1248
          %s1250 = sadd.s32 %s39, %s38
          %s1251 = smul.addr %s1250, 128
          %s1252 = scalar_lea.hbm %s7, %s1251
          %s1254 = sshll.u32 %s1238, 4
          %s1255 = int_to_ptr.vmem [resolvable:$true] %s1254
          %1257 = dma.vmem_to_hbm [thread:$0]  %s1255, 128, %s1252, %s1235
        $region84: #{tpu_custom_call.1} parent=47 // pred_fallthru
          _
        // Predicated region
        $region85: #{tpu_custom_call.1} parent=47 // pred_check
          %p1258 = pneg %p258
        $region86: #{tpu_custom_call.1} parent=47 // pred_check_branch
          %1260 = sbr.rel (%p1258) target = $region88
        $region87: #{tpu_custom_call.1} parent=47 // pred_region
          %s1262 = ssub.s32 256, 256
          %1263 = vsyncadd %s1240, %s1262
          %s1264 = smul.addr %s38, 4
          %s1265 = sadd.s32 %s39, %s1264
          %s1266 = smul.addr %s1265, 64
          %s1267 = scalar_lea.hbm %s8, %s1266
          %s1268 = sshll.u32 %s1243, 4
          %s1269 = int_to_ptr.vmem [resolvable:$true] %s1268
          %1274 = dma.vmem_to_hbm [thread:$0]  %s1269, 256, %s1267, %s1240, 64, 64, 4
        $region88: #{tpu_custom_call.1} parent=47 // pred_fallthru
          _
      $region48: #{tpu_custom_call.1} parent=5 // pred_fallthru
        _
      %p1275 = scmp.le.s32.totalorder 2, %s29
      // Predicated region
      $region89: #{tpu_custom_call.1} parent=5 // pred_check
        %p1276 = pneg %p1275
      $region90: #{tpu_custom_call.1} parent=5 // pred_check_branch
        %1278 = sbr.rel (%p1276) target = $region92
      $region91: #{tpu_custom_call.1} parent=5 // pred_region
        %s1279 = ssub.s32 %s29, 2
        // Predicated region
        $region93: #{tpu_custom_call.1} parent=91 // pred_check
          %p1280 = pneg %p236
        $region94: #{tpu_custom_call.1} parent=91 // pred_check_branch
          %1282 = sbr.rel (%p1280) target = $region96
        $region95: #{tpu_custom_call.1} parent=91 // pred_region
          %s1283 = sand.u32 %s221, 1
          %s1284 = scalar_lea.sflag [#allocation7], %s1283
          %s1285 = sand.u32 %s221, 1
          %s1286 = smul.addr %s1285, 8
          %s1287 = scalar_lea.vmem [#allocation17], %s1286
          %1288 = dma.done %s1284, 128
        $region96: #{tpu_custom_call.1} parent=91 // pred_fallthru
          _
        // Predicated region
        $region97: #{tpu_custom_call.1} parent=91 // pred_check
          %p1289 = pneg %p264
        $region98: #{tpu_custom_call.1} parent=91 // pred_check_branch
          %1291 = sbr.rel (%p1289) target = $region100
        $region99: #{tpu_custom_call.1} parent=91 // pred_region
          %s1292 = sand.u32 %s249, 1
          %s1293 = scalar_lea.sflag [#allocation19], %s1292
          %s1294 = sand.u32 %s249, 1
          %s1295 = smul.addr %s1294, 16
          %s1296 = scalar_lea.vmem [#allocation18], %s1295
          %1297 = dma.done %s1293, 256
        $region100: #{tpu_custom_call.1} parent=91 // pred_fallthru
          _
      $region92: #{tpu_custom_call.1} parent=5 // pred_fallthru
        _
    $region6: #{tpu_custom_call.1} parent=1 // loop_footer
      %s33 = sadd.s32 1, %s29
    $region7: #{tpu_custom_call.1} parent=1 // loop_footer_branch
      %28 = sbr.rel target = $region3
    $region8: #{tpu_custom_call.1} parent=1 // loop_exit
      _
    %1298 = vsyncpa [#allocation6], 1
    %s1299 = scalar_lea.sflag [#allocation6], 1
    %1300 = vsyncpa %s1299, 1
    %1301 = vsyncpa [#allocation9], 1
    %s1302 = scalar_lea.sflag [#allocation9], 1
    %1303 = vsyncpa %s1302, 1
    %1304 = vsyncpa [#allocation12], 1
    %1305 = vsyncpa [#allocation15], 1
    %1306 = vsyncpa [#allocation7], 1
    %s1307 = scalar_lea.sflag [#allocation7], 1
    %1308 = vsyncpa %s1307, 1
    %1309 = vsyncpa [#allocation19], 1
    %s1310 = scalar_lea.sflag [#allocation19], 1
    %1311 = vsyncpa %s1310, 1

</llo_original>
